<compile_context>
chip_gen: v7x
topology: tpu7x:2x2x1
jax: 0.10.0
libtpu: 0.0.40
codegen_flags: <defaults>
</compile_context>

<pallas_src>
import math
import functools

import jax
import jax.numpy as jnp
from jax import lax
from jax.experimental import pallas as pl
from jax.experimental.pallas import tpu as pltpu

_F32 = jnp.float32
_BF16 = jnp.bfloat16


# --------------------------------------------------------------------------- #
# helpers shared by both kernels
# --------------------------------------------------------------------------- #
def _norm(v, alpha, bias, d):
    """PyTorch Norm: alpha * (v - mean) / (std + eps) + bias, std uses ddof=1."""
    mean = jnp.mean(v, axis=-1, keepdims=True)
    c = v - mean
    var = jnp.sum(c * c, axis=-1, keepdims=True) * (1.0 / (d - 1))
    inv = pl.reciprocal(jnp.sqrt(var) + 1e-6, approx=True)   # EUP; frees VALU slots
    return alpha * (c * inv) + bias


def _split_heads(x2d, heads, use_einshape):
    """(rows, H*dk) -> (H, rows, dk)."""
    if use_einshape:
        return pltpu.einshape("q(hd)->hqd", x2d, h=heads)
    rows, d = x2d.shape
    dk = d // heads
    return jnp.stack([x2d[:, h * dk:(h + 1) * dk] for h in range(heads)], axis=0)


def _merge_heads(x3d, use_einshape):
    """(H, rows, dk) -> (rows, H*dk)."""
    if use_einshape:
        return pltpu.einshape("hqd->q(hd)", x3d)
    return jnp.concatenate([x3d[h] for h in range(x3d.shape[0])], axis=-1)


# --------------------------------------------------------------------------- #
# kernel 1: norm_1 + Q/K/V projections (lane-dense bf16 outputs)
# --------------------------------------------------------------------------- #
def _qkv_proj_kernel(x_ref, n1a_ref, n1b_ref,
                     wq_ref, bq_ref, wk_ref, bk_ref, wv_ref, bv_ref,
                     q_ref, k_ref, v_ref, *, dk):
    d = x_ref.shape[-1]
    x2 = _norm(x_ref[...].astype(_F32), n1a_ref[...], n1b_ref[...], d).astype(_BF16)
    q = jnp.dot(x2, wq_ref[...], preferred_element_type=_F32) + bq_ref[...]
    q_ref[...] = (q * (1.0 / math.sqrt(dk))).astype(_BF16)   # fold 1/sqrt(dk) into Q
    k_ref[...] = (jnp.dot(x2, wk_ref[...], preferred_element_type=_F32)
                  + bk_ref[...]).astype(_BF16)
    v_ref[...] = (jnp.dot(x2, wv_ref[...], preferred_element_type=_F32)
                  + bv_ref[...]).astype(_BF16)


# --------------------------------------------------------------------------- #
# kernel 2: flash attention (KV grid axis) + out-proj + norm_2 + chunked FFN
# --------------------------------------------------------------------------- #
def _attn_ffn_kernel(x_ref, q_ref, k_ref, v_ref,
                     wo_ref, bo_ref, n2a_ref, n2b_ref,
                     w1_ref, b1_ref, w2_ref, b2_ref,
                     o_ref,
                     m_scr, l_scr, acc_scr,
                     *, heads, tq, tkv, ff_chunk, use_einshape):
    kv = pl.program_id(2)
    d = x_ref.shape[-1]

    @pl.when(kv == 0)
    def _():
        m_scr[...] = jnp.full(m_scr.shape, -jnp.inf, dtype=_F32)
        l_scr[...] = jnp.zeros(l_scr.shape, dtype=_F32)
        acc_scr[...] = jnp.zeros(acc_scr.shape, dtype=_F32)

    # ---- online-softmax update for this (query tile, KV tile) ----
    qh = _split_heads(q_ref[...], heads, use_einshape)          # (H, TQ,  dk) bf16
    kh = _split_heads(k_ref[...], heads, use_einshape)          # (H, TKV, dk) bf16
    vh = _split_heads(v_ref[...], heads, use_einshape)          # (H, TKV, dk) bf16

    s = jnp.einsum("hqd,hkd->hqk", qh, kh, preferred_element_type=_F32)
    m_prev = m_scr[...]
    m_new = jnp.maximum(m_prev, jnp.max(s, axis=-1, keepdims=True))
    alpha = jnp.exp(m_prev - m_new)
    p = jnp.exp(s - m_new)                                      # mask is None here
    l_scr[...] = alpha * l_scr[...] + jnp.sum(p, axis=-1, keepdims=True)
    acc_scr[...] = alpha * acc_scr[...] + jnp.einsum(
        "hqk,hkd->hqd", p.astype(_BF16), vh, preferred_element_type=_F32)
    m_scr[...] = m_new

    # ---- last KV step: out-proj + residual, then norm_2 + FFN + residual ----
    @pl.when(kv == pl.num_programs(2) - 1)
    def _():
        o_h = acc_scr[...] * pl.reciprocal(l_scr[...], approx=True)   # (H, TQ, dk)
        concat = _merge_heads(o_h, use_einshape)                      # (TQ, D) f32
        attn = jnp.dot(concat.astype(_BF16), wo_ref[...],
                       preferred_element_type=_F32) + bo_ref[...]
        x_t = x_ref[...].astype(_F32) + attn                          # dropout_1 == id
        x2 = _norm(x_t, n2a_ref[...], n2b_ref[...], d).astype(_BF16)

        d_ff = w1_ref.shape[1]
        n_chunks = d_ff // ff_chunk
        if n_chunks <= 4:
            # Few chunks: fully-unrolled static slices (free on refs).
            ff = jnp.zeros((tq, d), _F32)
            for c in range(n_chunks):
                sl = slice(c * ff_chunk, (c + 1) * ff_chunk)
                h1 = jnp.dot(x2, w1_ref[:, sl], preferred_element_type=_F32) + b1_ref[:, sl]
                h1 = jnp.maximum(h1, 0.0).astype(_BF16)               # ReLU; FF dropout == id
                ff = ff + jnp.dot(h1, w2_ref[sl, :], preferred_element_type=_F32)
        else:
            # Many chunks: fori_loop bounds live ranges / vreg pressure (perf review).
            def ff_body(c, acc):
                col = pl.multiple_of(c * ff_chunk, ff_chunk)
                h1 = (jnp.dot(x2, w1_ref[:, pl.ds(col, ff_chunk)],
                              preferred_element_type=_F32)
                      + b1_ref[:, pl.ds(col, ff_chunk)])
                h1 = jnp.maximum(h1, 0.0).astype(_BF16)
                return acc + jnp.dot(h1, w2_ref[pl.ds(col, ff_chunk), :],
                                     preferred_element_type=_F32)
            ff = lax.fori_loop(0, n_chunks, ff_body, jnp.zeros((tq, d), _F32))
        ff = ff + b2_ref[...]

        o_ref[...] = (x_t + ff).astype(o_ref.dtype)                   # dropout_2 == id


# --------------------------------------------------------------------------- #
# wrapper
# --------------------------------------------------------------------------- #
def _pick_tile(n, candidates):
    for t in candidates:
        if n % t == 0:
            return t
    return n   # fallback: whole axis (keep S / d_ff nicely divisible in production)


def _round_up(v, m):
    return (v + m - 1) // m * m


def _vmem_kwargs(est_bytes):
    """Override the scoped-VMEM limit only when needed, capped generation-aware
    at ~80% of this chip's physical VMEM (perf review)."""
    if est_bytes <= 12 * 1024 * 1024:
        return {}
    try:
        phys = int(pltpu.get_tpu_info().vmem_capacity_bytes)
    except Exception:
        phys = 64 * 1024 * 1024   # conservative (v7x per-core VMEM)
    return {"vmem_limit_bytes": min(int(est_bytes * 1.3), int(phys * 0.8))}


def _weight_spec(arr, grid_rank, single_buffer):
    nd = arr.ndim
    if grid_rank == 2:
        imap = lambda b, s, _n=nd: (0,) * _n
    else:
        imap = lambda b, q, k, _n=nd: (0,) * _n
    if single_buffer:
        # Constant index_map => fetched once; don't reserve a second VMEM buffer.
        return pl.BlockSpec(arr.shape, imap, pipeline_mode=pl.Buffered(buffer_count=1))
    return pl.BlockSpec(arr.shape, imap)


def _encoder_layer(x, params, heads, *, fast):
    B, S, D = x.shape
    assert D % heads == 0, "d_model must be divisible by heads"
    dk = D // heads
    d_ff = params["w1"].shape[1]

    ts = _pick_tile(S, (256, 128, 64, 32, 16, 8))        # seq tile, QKV projection
    tq = _pick_tile(S, (256, 128, 64, 32, 16, 8))        # query tile
    tkv = _pick_tile(S, (512, 256, 128, 64, 32, 16, 8))  # KV tile (online softmax)
    ff_chunk = _pick_tile(d_ff, (512, 256, 128))         # d_ff chunk for fused FFN

    wbytes = lambda ws: sum(int(w.size) * w.dtype.itemsize for w in ws)
    wbuf = 1 if fast else 2                              # weight buffering factor

    # ---------- kernel 1: norm_1 + Q/K/V projection ----------
    qkv_w = [params["n1a"], params["n1b"],
             params["wq"], params["bq"], params["wk"], params["bk"],
             params["wv"], params["bv"]]
    est1 = (wbuf * wbytes(qkv_w)
            + 2 * (ts * D * 4 + 3 * ts * D * 2)
            + 6 * ts * _round_up(D, 128) * 4)
    q, k, v = pl.pallas_call(
        functools.partial(_qkv_proj_kernel, dk=dk),
        out_shape=tuple(jax.ShapeDtypeStruct((B, S, D), _BF16) for _ in range(3)),
        grid_spec=pltpu.PrefetchScalarGridSpec(
            num_scalar_prefetch=0,
            grid=(B, S // ts),
            in_specs=[pl.BlockSpec((None, ts, D), lambda b, si: (b, si, 0))]
                     + [_weight_spec(w, 2, fast) for w in qkv_w],
            out_specs=tuple(pl.BlockSpec((None, ts, D), lambda b, si: (b, si, 0))
                            for _ in range(3)),
        ),
        compiler_params=pltpu.CompilerParams(
            dimension_semantics=("parallel", "parallel"), **_vmem_kwargs(est1)),
    )(x, *qkv_w)

    # ---------- kernel 2: flash attention + out-proj + norm_2 + FFN ----------
    attn_w = [params["wo"], params["bo"], params["n2a"], params["n2b"],
              params["w1"], params["b1"], params["w2"], params["b2"]]
    est2 = (wbuf * wbytes(attn_w)
            + 2 * (2 * tq * D * 4 + tq * D * 2 + 2 * tkv * D * 2)       # x,out,q,k,v tiles
            + (2 * 128 + _round_up(dk, 128)) * heads * _round_up(tq, 8) * 4  # m/l/acc scratch
            + 3 * heads * tq * _round_up(tkv, 128) * 4                  # s / p working set
            + 2 * tq * _round_up(ff_chunk, 128) * 4                     # FFN hidden chunk
            + 6 * tq * _round_up(D, 128) * 4)                           # misc (tq, D) temps
    kernel = functools.partial(
        _attn_ffn_kernel, heads=heads, tq=tq, tkv=tkv, ff_chunk=ff_chunk,
        use_einshape=fast)
    return pl.pallas_call(
        kernel,
        out_shape=jax.ShapeDtypeStruct((B, S, D), x.dtype),
        grid_spec=pltpu.PrefetchScalarGridSpec(
            num_scalar_prefetch=0,
            grid=(B, S // tq, S // tkv),
            in_specs=[pl.BlockSpec((None, tq, D), lambda b, qi, kv: (b, qi, 0)),   # x
                      pl.BlockSpec((None, tq, D), lambda b, qi, kv: (b, qi, 0)),   # q
                      pl.BlockSpec((None, tkv, D), lambda b, qi, kv: (b, kv, 0)),  # k
                      pl.BlockSpec((None, tkv, D), lambda b, qi, kv: (b, kv, 0))]  # v
                     + [_weight_spec(w, 3, fast) for w in attn_w],
            out_specs=pl.BlockSpec((None, tq, D), lambda b, qi, kv: (b, qi, 0)),
            scratch_shapes=[pltpu.VMEM((heads, tq, 1), _F32),    # running max
                            pltpu.VMEM((heads, tq, 1), _F32),    # running denominator
                            pltpu.VMEM((heads, tq, dk), _F32)],  # running numerator
        ),
        compiler_params=pltpu.CompilerParams(
            dimension_semantics=("parallel", "parallel", "arbitrary"),
            **_vmem_kwargs(est2)),
    )(x, q, k, v, *attn_w)


def encoder_layer(x, params, heads):
    """x: (B, S, D) f32; params from prepare_params(init_params(...)).  Eval mode.

    Fast path = einshape head regroup + single-buffered constant weights; the
    conservative fallback keeps identical math for jax builds that reject either.
    """
    try:
        return _encoder_layer(x, params, heads, fast=True)
    except Exception:   # compatibility fallback (pl.Buffered(1) / einshape grouping)
        return _encoder_layer(x, params, heads, fast=False)


# --------------------------------------------------------------------------- #
# parameters + pure-JAX reference
# --------------------------------------------------------------------------- #
def init_params(key, d_model, d_ff):
    """Deterministic synthetic parameters. Linear weights stored (in, out), f32."""
    ks = jax.random.split(key, 6)

    def lin(k, din, dout):
        kw, kb = jax.random.split(k)
        w = jax.random.normal(kw, (din, dout), _F32) * (1.0 / math.sqrt(din))
        b = jax.random.normal(kb, (1, dout), _F32) * 0.02
        return w, b

    wq, bq = lin(ks[0], d_model, d_model)
    wk, bk = lin(ks[1], d_model, d_model)
    wv, bv = lin(ks[2], d_model, d_model)
    wo, bo = lin(ks[3], d_model, d_model)
    w1, b1 = lin(ks[4], d_model, d_ff)
    w2, b2 = lin(ks[5], d_ff, d_model)
    return {
        "n1a": jnp.ones((1, d_model), _F32), "n1b": jnp.zeros((1, d_model), _F32),
        "wq": wq, "bq": bq, "wk": wk, "bk": bk, "wv": wv, "bv": bv,
        "wo": wo, "bo": bo,
        "n2a": jnp.ones((1, d_model), _F32), "n2b": jnp.zeros((1, d_model), _F32),
        "w1": w1, "b1": b1, "w2": w2, "b2": b2,
    }


def prepare_params(params):
    """One-time bf16 cast of matmul weights (kept out of the per-call path)."""
    out = dict(params)
    for name in ("wq", "wk", "wv", "wo", "w1", "w2"):
        out[name] = params[name].astype(_BF16)
    return out


def encoder_layer_ref(x, p, heads):
    """Pure-JAX f32 reference mirroring the PyTorch forward (eval mode, mask=None)."""
    B, S, D = x.shape
    dk = D // heads
    eps = 1e-6

    def norm(v, a, b):
        mean = jnp.mean(v, axis=-1, keepdims=True)
        c = v - mean
        std = jnp.sqrt(jnp.sum(c * c, axis=-1, keepdims=True) / (D - 1))
        return a * c / (std + eps) + b

    x2 = norm(x, p["n1a"], p["n1b"])
    q = (x2 @ p["wq"] + p["bq"]).reshape(B, S, heads, dk).transpose(0, 2, 1, 3)
    k = (x2 @ p["wk"] + p["bk"]).reshape(B, S, heads, dk).transpose(0, 2, 1, 3)
    v = (x2 @ p["wv"] + p["bv"]).reshape(B, S, heads, dk).transpose(0, 2, 1, 3)
    s = jnp.einsum("bhqd,bhkd->bhqk", q, k) / math.sqrt(dk)
    s = jax.nn.softmax(s, axis=-1)
    o = jnp.einsum("bhqk,bhkd->bhqd", s, v).transpose(0, 2, 1, 3).reshape(B, S, D)
    x = x + (o @ p["wo"] + p["bo"])
    x2 = norm(x, p["n2a"], p["n2b"])
    ff = jnp.maximum(x2 @ p["w1"] + p["b1"], 0.0) @ p["w2"] + p["b2"]
    return x + ff


if __name__ == "__main__":
    # Small but lane-dense shapes: D multiple of 128, S multiple of 8.
    B, S, D, heads, d_ff = 2, 8, 128, 4, 2048   # d_ff = FeedForward's default 2048

    key = jax.random.PRNGKey(0)
    kx, kp = jax.random.split(key)
    x = jax.random.normal(kx, (B, S, D), _F32)
    params_f32 = init_params(kp, D, d_ff)
    params = prepare_params(params_f32)          # one-time bf16 cast (perf review)

    out = jax.block_until_ready(encoder_layer(x, params, heads))
    ref = jax.block_until_ready(encoder_layer_ref(x, params_f32, heads))

    assert out.shape == (B, S, D)
    # Tolerance loosened vs. the f32 reference: bf16 matmul operands (f32 accum),
    # approximate EUP reciprocals, and online-softmax accumulation order.
    assert jnp.allclose(out, ref, atol=7e-2, rtol=7e-2), "mismatch vs reference"
    print("KERNEL_OK")
</pallas_src>

<mosaic_0001>
module attributes {stable_mosaic.version = 11 : i64} {
  func.func @_qkv_proj_kernel(%arg0: i32, %arg1: i32, %arg2: memref<1x8x128xf32, #tpu.memory_space<vmem>>, %arg3: memref<1x128xf32, #tpu.memory_space<vmem>>, %arg4: memref<1x128xf32, #tpu.memory_space<vmem>>, %arg5: memref<128x128xbf16, #tpu.memory_space<vmem>>, %arg6: memref<1x128xf32, #tpu.memory_space<vmem>>, %arg7: memref<128x128xbf16, #tpu.memory_space<vmem>>, %arg8: memref<1x128xf32, #tpu.memory_space<vmem>>, %arg9: memref<128x128xbf16, #tpu.memory_space<vmem>>, %arg10: memref<1x128xf32, #tpu.memory_space<vmem>>, %arg11: memref<1x8x128xbf16, #tpu.memory_space<vmem>>, %arg12: memref<1x8x128xbf16, #tpu.memory_space<vmem>>, %arg13: memref<1x8x128xbf16, #tpu.memory_space<vmem>>) attributes {dimension_semantics = [#tpu.dimension_semantics<parallel>, #tpu.dimension_semantics<parallel>], iteration_bounds = array<i64: 2, 1>, scalar_prefetch = 0 : i64, scratch_operands = 0 : i64, tpu.core_type = #tpu.core_type<tc>, window_params = [{transform_indices = @transform_0, window_bounds = array<i64: 1, 8, 128>}, {pipeline_mode = #tpu.pipeline_mode<synchronous>, transform_indices = @transform_1, window_bounds = array<i64: 1, 128>}, {pipeline_mode = #tpu.pipeline_mode<synchronous>, transform_indices = @transform_2, window_bounds = array<i64: 1, 128>}, {pipeline_mode = #tpu.pipeline_mode<synchronous>, transform_indices = @transform_3, window_bounds = array<i64: 128, 128>}, {pipeline_mode = #tpu.pipeline_mode<synchronous>, transform_indices = @transform_4, window_bounds = array<i64: 1, 128>}, {pipeline_mode = #tpu.pipeline_mode<synchronous>, transform_indices = @transform_5, window_bounds = array<i64: 128, 128>}, {pipeline_mode = #tpu.pipeline_mode<synchronous>, transform_indices = @transform_6, window_bounds = array<i64: 1, 128>}, {pipeline_mode = #tpu.pipeline_mode<synchronous>, transform_indices = @transform_7, window_bounds = array<i64: 128, 128>}, {pipeline_mode = #tpu.pipeline_mode<synchronous>, transform_indices = @transform_8, window_bounds = array<i64: 1, 128>}, {transform_indices = @transform_9, window_bounds = array<i64: 1, 8, 128>}, {transform_indices = @transform_10, window_bounds = array<i64: 1, 8, 128>}, {transform_indices = @transform_11, window_bounds = array<i64: 1, 8, 128>}]} {
    %c0 = arith.constant 0 : index
    %c0_0 = arith.constant 0 : index
    %c0_1 = arith.constant 0 : index
    %0 = vector.load %arg2[%c0, %c0_0, %c0_1] : memref<1x8x128xf32, #tpu.memory_space<vmem>>, vector<1x8x128xf32>
    %1 = vector.shape_cast %0 : vector<1x8x128xf32> to vector<8x128xf32>
    %c0_2 = arith.constant 0 : index
    %c0_3 = arith.constant 0 : index
    %2 = vector.load %arg3[%c0_2, %c0_3] : memref<1x128xf32, #tpu.memory_space<vmem>>, vector<1x128xf32>
    %c0_4 = arith.constant 0 : index
    %c0_5 = arith.constant 0 : index
    %3 = vector.load %arg4[%c0_4, %c0_5] : memref<1x128xf32, #tpu.memory_space<vmem>>, vector<1x128xf32>
    %cst = arith.constant dense<0.000000e+00> : vector<8xf32>
    %4 = vector.multi_reduction <add>, %1, %cst [1] : vector<8x128xf32> to vector<8xf32>
    %5 = vector.shape_cast %4 : vector<8xf32> to vector<8x1xf32>
    %cst_6 = arith.constant 1.280000e+02 : f32
    %6 = vector.broadcast %cst_6 : f32 to vector<8x1xf32>
    %7 = arith.divf %5, %6 : vector<8x1xf32>
    %8 = vector.broadcast %7 : vector<8x1xf32> to vector<8x128xf32>
    %9 = arith.subf %1, %8 : vector<8x128xf32>
    %10 = arith.mulf %9, %9 : vector<8x128xf32>
    %cst_7 = arith.constant dense<0.000000e+00> : vector<8xf32>
    %11 = vector.multi_reduction <add>, %10, %cst_7 [1] : vector<8x128xf32> to vector<8xf32>
    %12 = vector.shape_cast %11 : vector<8xf32> to vector<8x1xf32>
    %cst_8 = arith.constant 0.00787401571 : f32
    %13 = vector.broadcast %cst_8 : f32 to vector<8x1xf32>
    %14 = arith.mulf %12, %13 : vector<8x1xf32>
    %15 = math.sqrt %14 : vector<8x1xf32>
    %cst_9 = arith.constant 9.99999997E-7 : f32
    %16 = vector.broadcast %cst_9 : f32 to vector<8x1xf32>
    %17 = arith.addf %15, %16 : vector<8x1xf32>
    %18 = tpu.reciprocal %17 {approx = true} : vector<8x1xf32> -> vector<8x1xf32>
    %19 = vector.broadcast %18 : vector<8x1xf32> to vector<8x128xf32>
    %20 = arith.mulf %9, %19 : vector<8x128xf32>
    %21 = vector.broadcast %2 : vector<1x128xf32> to vector<8x128xf32>
    %22 = arith.mulf %21, %20 : vector<8x128xf32>
    %23 = vector.broadcast %3 : vector<1x128xf32> to vector<8x128xf32>
    %24 = arith.addf %22, %23 : vector<8x128xf32>
    %25 = arith.truncf %24 : vector<8x128xf32> to vector<8x128xbf16>
    %c0_10 = arith.constant 0 : index
    %c0_11 = arith.constant 0 : index
    %26 = vector.load %arg5[%c0_10, %c0_11] : memref<128x128xbf16, #tpu.memory_space<vmem>>, vector<128x128xbf16>
    %cst_12 = arith.constant dense<0.000000e+00> : vector<8x128xf32>
    %27 = tpu.matmul %25, %26, %cst_12 {dimension_numbers = #tpu.dot_dimension_numbers<[1], [0], [0], [1], [0, 0, 1, 1], [], []>} : vector<8x128xbf16>, vector<128x128xbf16>, vector<8x128xf32> -> vector<8x128xf32>
    %c0_13 = arith.constant 0 : index
    %c0_14 = arith.constant 0 : index
    %28 = vector.load %arg6[%c0_13, %c0_14] : memref<1x128xf32, #tpu.memory_space<vmem>>, vector<1x128xf32>
    %29 = vector.broadcast %28 : vector<1x128xf32> to vector<8x128xf32>
    %30 = arith.addf %27, %29 : vector<8x128xf32>
    %cst_15 = arith.constant 0.176776692 : f32
    %31 = vector.broadcast %cst_15 : f32 to vector<8x128xf32>
    %32 = arith.mulf %30, %31 : vector<8x128xf32>
    %33 = arith.truncf %32 : vector<8x128xf32> to vector<8x128xbf16>
    %c0_16 = arith.constant 0 : index
    %c0_17 = arith.constant 0 : index
    %c0_18 = arith.constant 0 : index
    %34 = vector.load %arg11[%c0_16, %c0_17, %c0_18] : memref<1x8x128xbf16, #tpu.memory_space<vmem>>, vector<1x8x128xbf16>
    %35 = vector.shape_cast %34 : vector<1x8x128xbf16> to vector<8x128xbf16>
    %36 = vector.shape_cast %33 : vector<8x128xbf16> to vector<1x8x128xbf16>
    tpu.vector_store %arg11[%c0_16, %c0_17, %c0_18], %36 {strides = array<i32>} : memref<1x8x128xbf16, #tpu.memory_space<vmem>>, vector<1x8x128xbf16>,
    %c0_19 = arith.constant 0 : index
    %c0_20 = arith.constant 0 : index
    %37 = vector.load %arg7[%c0_19, %c0_20] : memref<128x128xbf16, #tpu.memory_space<vmem>>, vector<128x128xbf16>
    %cst_21 = arith.constant dense<0.000000e+00> : vector<8x128xf32>
    %38 = tpu.matmul %25, %37, %cst_21 {dimension_numbers = #tpu.dot_dimension_numbers<[1], [0], [0], [1], [0, 0, 1, 1], [], []>} : vector<8x128xbf16>, vector<128x128xbf16>, vector<8x128xf32> -> vector<8x128xf32>
    %c0_22 = arith.constant 0 : index
    %c0_23 = arith.constant 0 : index
    %39 = vector.load %arg8[%c0_22, %c0_23] : memref<1x128xf32, #tpu.memory_space<vmem>>, vector<1x128xf32>
    %40 = vector.broadcast %39 : vector<1x128xf32> to vector<8x128xf32>
    %41 = arith.addf %38, %40 : vector<8x128xf32>
    %42 = arith.truncf %41 : vector<8x128xf32> to vector<8x128xbf16>
    %c0_24 = arith.constant 0 : index
    %c0_25 = arith.constant 0 : index
    %c0_26 = arith.constant 0 : index
    %43 = vector.load %arg12[%c0_24, %c0_25, %c0_26] : memref<1x8x128xbf16, #tpu.memory_space<vmem>>, vector<1x8x128xbf16>
    %44 = vector.shape_cast %43 : vector<1x8x128xbf16> to vector<8x128xbf16>
    %45 = vector.shape_cast %42 : vector<8x128xbf16> to vector<1x8x128xbf16>
    tpu.vector_store %arg12[%c0_24, %c0_25, %c0_26], %45 {strides = array<i32>} : memref<1x8x128xbf16, #tpu.memory_space<vmem>>, vector<1x8x128xbf16>,
    %c0_27 = arith.constant 0 : index
    %c0_28 = arith.constant 0 : index
    %46 = vector.load %arg9[%c0_27, %c0_28] : memref<128x128xbf16, #tpu.memory_space<vmem>>, vector<128x128xbf16>
    %cst_29 = arith.constant dense<0.000000e+00> : vector<8x128xf32>
    %47 = tpu.matmul %25, %46, %cst_29 {dimension_numbers = #tpu.dot_dimension_numbers<[1], [0], [0], [1], [0, 0, 1, 1], [], []>} : vector<8x128xbf16>, vector<128x128xbf16>, vector<8x128xf32> -> vector<8x128xf32>
    %c0_30 = arith.constant 0 : index
    %c0_31 = arith.constant 0 : index
    %48 = vector.load %arg10[%c0_30, %c0_31] : memref<1x128xf32, #tpu.memory_space<vmem>>, vector<1x128xf32>
    %49 = vector.broadcast %48 : vector<1x128xf32> to vector<8x128xf32>
    %50 = arith.addf %47, %49 : vector<8x128xf32>
    %51 = arith.truncf %50 : vector<8x128xf32> to vector<8x128xbf16>
    %c0_32 = arith.constant 0 : index
    %c0_33 = arith.constant 0 : index
    %c0_34 = arith.constant 0 : index
    %52 = vector.load %arg13[%c0_32, %c0_33, %c0_34] : memref<1x8x128xbf16, #tpu.memory_space<vmem>>, vector<1x8x128xbf16>
    %53 = vector.shape_cast %52 : vector<1x8x128xbf16> to vector<8x128xbf16>
    %54 = vector.shape_cast %51 : vector<8x128xbf16> to vector<1x8x128xbf16>
    tpu.vector_store %arg13[%c0_32, %c0_33, %c0_34], %54 {strides = array<i32>} : memref<1x8x128xbf16, #tpu.memory_space<vmem>>, vector<1x8x128xbf16>,
    return
  }
  func.func @transform_0(%arg0: i32, %arg1: i32) -> (i32, i32, i32) {
    %c0_i32 = arith.constant 0 : i32
    %c0_i32_0 = arith.constant 0 : i32
    return %arg0, %arg1, %c0_i32 : i32, i32, i32
  }
  func.func @transform_1(%arg0: i32, %arg1: i32) -> (i32, i32) {
    %c0_i32 = arith.constant 0 : i32
    %c0_i32_0 = arith.constant 0 : i32
    %c0_i32_1 = arith.constant 0 : i32
    return %c0_i32, %c0_i32_0 : i32, i32
  }
  func.func @transform_2(%arg0: i32, %arg1: i32) -> (i32, i32) {
    %c0_i32 = arith.constant 0 : i32
    %c0_i32_0 = arith.constant 0 : i32
    %c0_i32_1 = arith.constant 0 : i32
    return %c0_i32, %c0_i32_0 : i32, i32
  }
  func.func @transform_3(%arg0: i32, %arg1: i32) -> (i32, i32) {
    %c0_i32 = arith.constant 0 : i32
    %c0_i32_0 = arith.constant 0 : i32
    %c0_i32_1 = arith.constant 0 : i32
    return %c0_i32, %c0_i32_0 : i32, i32
  }
  func.func @transform_4(%arg0: i32, %arg1: i32) -> (i32, i32) {
    %c0_i32 = arith.constant 0 : i32
    %c0_i32_0 = arith.constant 0 : i32
    %c0_i32_1 = arith.constant 0 : i32
    return %c0_i32, %c0_i32_0 : i32, i32
  }
  func.func @transform_5(%arg0: i32, %arg1: i32) -> (i32, i32) {
    %c0_i32 = arith.constant 0 : i32
    %c0_i32_0 = arith.constant 0 : i32
    %c0_i32_1 = arith.constant 0 : i32
    return %c0_i32, %c0_i32_0 : i32, i32
  }
  func.func @transform_6(%arg0: i32, %arg1: i32) -> (i32, i32) {
    %c0_i32 = arith.constant 0 : i32
    %c0_i32_0 = arith.constant 0 : i32
    %c0_i32_1 = arith.constant 0 : i32
    return %c0_i32, %c0_i32_0 : i32, i32
  }
  func.func @transform_7(%arg0: i32, %arg1: i32) -> (i32, i32) {
    %c0_i32 = arith.constant 0 : i32
    %c0_i32_0 = arith.constant 0 : i32
    %c0_i32_1 = arith.constant 0 : i32
    return %c0_i32, %c0_i32_0 : i32, i32
  }
  func.func @transform_8(%arg0: i32, %arg1: i32) -> (i32, i32) {
    %c0_i32 = arith.constant 0 : i32
    %c0_i32_0 = arith.constant 0 : i32
    %c0_i32_1 = arith.constant 0 : i32
    return %c0_i32, %c0_i32_0 : i32, i32
  }
  func.func @transform_9(%arg0: i32, %arg1: i32) -> (i32, i32, i32) {
    %c0_i32 = arith.constant 0 : i32
    %c0_i32_0 = arith.constant 0 : i32
    return %arg0, %arg1, %c0_i32 : i32, i32, i32
  }
  func.func @transform_10(%arg0: i32, %arg1: i32) -> (i32, i32, i32) {
    %c0_i32 = arith.constant 0 : i32
    %c0_i32_0 = arith.constant 0 : i32
    return %arg0, %arg1, %c0_i32 : i32, i32, i32
  }
  func.func @transform_11(%arg0: i32, %arg1: i32) -> (i32, i32, i32) {
    %c0_i32 = arith.constant 0 : i32
    %c0_i32_0 = arith.constant 0 : i32
    return %arg0, %arg1, %c0_i32 : i32, i32, i32
  }
}

module attributes {stable_mosaic.version = 11 : i64} {
  func.func @_qkv_proj_kernel(%arg0: i32, %arg1: i32, %arg2: memref<1x8x128xf32, #tpu.memory_space<vmem>>, %arg3: memref<1x128xf32, #tpu.memory_space<vmem>>, %arg4: memref<1x128xf32, #tpu.memory_space<vmem>>, %arg5: memref<128x128xbf16, #tpu.memory_space<vmem>>, %arg6: memref<1x128xf32, #tpu.memory_space<vmem>>, %arg7: memref<128x128xbf16, #tpu.memory_space<vmem>>, %arg8: memref<1x128xf32, #tpu.memory_space<vmem>>, %arg9: memref<128x128xbf16, #tpu.memory_space<vmem>>, %arg10: memref<1x128xf32, #tpu.memory_space<vmem>>, %arg11: memref<1x8x128xbf16, #tpu.memory_space<vmem>>, %arg12: memref<1x8x128xbf16, #tpu.memory_space<vmem>>, %arg13: memref<1x8x128xbf16, #tpu.memory_space<vmem>>) attributes {dimension_semantics = [#tpu.dimension_semantics<parallel>, #tpu.dimension_semantics<parallel>], iteration_bounds = array<i64: 2, 1>, scalar_prefetch = 0 : i64, scratch_operands = 0 : i64, tpu.core_type = #tpu.core_type<tc>, window_params = [{transform_indices = @transform_0, window_bounds = array<i64: 1, 8, 128>}, {pipeline_mode = #tpu.pipeline_mode<synchronous>, transform_indices = @transform_1, window_bounds = array<i64: 1, 128>}, {pipeline_mode = #tpu.pipeline_mode<synchronous>, transform_indices = @transform_2, window_bounds = array<i64: 1, 128>}, {pipeline_mode = #tpu.pipeline_mode<synchronous>, transform_indices = @transform_3, window_bounds = array<i64: 128, 128>}, {pipeline_mode = #tpu.pipeline_mode<synchronous>, transform_indices = @transform_4, window_bounds = array<i64: 1, 128>}, {pipeline_mode = #tpu.pipeline_mode<synchronous>, transform_indices = @transform_5, window_bounds = array<i64: 128, 128>}, {pipeline_mode = #tpu.pipeline_mode<synchronous>, transform_indices = @transform_6, window_bounds = array<i64: 1, 128>}, {pipeline_mode = #tpu.pipeline_mode<synchronous>, transform_indices = @transform_7, window_bounds = array<i64: 128, 128>}, {pipeline_mode = #tpu.pipeline_mode<synchronous>, transform_indices = @transform_8, window_bounds = array<i64: 1, 128>}, {transform_indices = @transform_9, window_bounds = array<i64: 1, 8, 128>}, {transform_indices = @transform_10, window_bounds = array<i64: 1, 8, 128>}, {transform_indices = @transform_11, window_bounds = array<i64: 1, 8, 128>}]} {
    %c0 = arith.constant 0 : index
    %c0_0 = arith.constant 0 : index
    %c0_1 = arith.constant 0 : index
    %0 = vector.load %arg2[%c0, %c0_0, %c0_1] : memref<1x8x128xf32, #tpu.memory_space<vmem>>, vector<1x8x128xf32>
    %1 = vector.shape_cast %0 : vector<1x8x128xf32> to vector<8x128xf32>
    %c0_2 = arith.constant 0 : index
    %c0_3 = arith.constant 0 : index
    %2 = vector.load %arg3[%c0_2, %c0_3] : memref<1x128xf32, #tpu.memory_space<vmem>>, vector<1x128xf32>
    %c0_4 = arith.constant 0 : index
    %c0_5 = arith.constant 0 : index
    %3 = vector.load %arg4[%c0_4, %c0_5] : memref<1x128xf32, #tpu.memory_space<vmem>>, vector<1x128xf32>
    %cst = arith.constant dense<0.000000e+00> : vector<8xf32>
    %4 = vector.multi_reduction <add>, %1, %cst [1] : vector<8x128xf32> to vector<8xf32>
    %5 = vector.shape_cast %4 : vector<8xf32> to vector<8x1xf32>
    %cst_6 = arith.constant 1.280000e+02 : f32
    %6 = vector.broadcast %cst_6 : f32 to vector<8x1xf32>
    %7 = arith.divf %5, %6 : vector<8x1xf32>
    %8 = vector.broadcast %7 : vector<8x1xf32> to vector<8x128xf32>
    %9 = arith.subf %1, %8 : vector<8x128xf32>
    %10 = arith.mulf %9, %9 : vector<8x128xf32>
    %cst_7 = arith.constant dense<0.000000e+00> : vector<8xf32>
    %11 = vector.multi_reduction <add>, %10, %cst_7 [1] : vector<8x128xf32> to vector<8xf32>
    %12 = vector.shape_cast %11 : vector<8xf32> to vector<8x1xf32>
    %cst_8 = arith.constant 0.00787401571 : f32
    %13 = vector.broadcast %cst_8 : f32 to vector<8x1xf32>
    %14 = arith.mulf %12, %13 : vector<8x1xf32>
    %15 = math.sqrt %14 : vector<8x1xf32>
    %cst_9 = arith.constant 9.99999997E-7 : f32
    %16 = vector.broadcast %cst_9 : f32 to vector<8x1xf32>
    %17 = arith.addf %15, %16 : vector<8x1xf32>
    %18 = tpu.reciprocal %17 {approx = true} : vector<8x1xf32> -> vector<8x1xf32>
    %19 = vector.broadcast %18 : vector<8x1xf32> to vector<8x128xf32>
    %20 = arith.mulf %9, %19 : vector<8x128xf32>
    %21 = vector.broadcast %2 : vector<1x128xf32> to vector<8x128xf32>
    %22 = arith.mulf %21, %20 : vector<8x128xf32>
    %23 = vector.broadcast %3 : vector<1x128xf32> to vector<8x128xf32>
    %24 = arith.addf %22, %23 : vector<8x128xf32>
    %25 = arith.truncf %24 : vector<8x128xf32> to vector<8x128xbf16>
    %c0_10 = arith.constant 0 : index
    %c0_11 = arith.constant 0 : index
    %26 = vector.load %arg5[%c0_10, %c0_11] : memref<128x128xbf16, #tpu.memory_space<vmem>>, vector<128x128xbf16>
    %cst_12 = arith.constant dense<0.000000e+00> : vector<8x128xf32>
    %27 = tpu.matmul %25, %26, %cst_12 {dimension_numbers = #tpu.dot_dimension_numbers<[1], [0], [0], [1], [0, 0, 1, 1], [], []>} : vector<8x128xbf16>, vector<128x128xbf16>, vector<8x128xf32> -> vector<8x128xf32>
    %c0_13 = arith.constant 0 : index
    %c0_14 = arith.constant 0 : index
    %28 = vector.load %arg6[%c0_13, %c0_14] : memref<1x128xf32, #tpu.memory_space<vmem>>, vector<1x128xf32>
    %29 = vector.broadcast %28 : vector<1x128xf32> to vector<8x128xf32>
    %30 = arith.addf %27, %29 : vector<8x128xf32>
    %cst_15 = arith.constant 0.176776692 : f32
    %31 = vector.broadcast %cst_15 : f32 to vector<8x128xf32>
    %32 = arith.mulf %30, %31 : vector<8x128xf32>
    %33 = arith.truncf %32 : vector<8x128xf32> to vector<8x128xbf16>
    %c0_16 = arith.constant 0 : index
    %c0_17 = arith.constant 0 : index
    %c0_18 = arith.constant 0 : index
    %34 = vector.load %arg11[%c0_16, %c0_17, %c0_18] : memref<1x8x128xbf16, #tpu.memory_space<vmem>>, vector<1x8x128xbf16>
    %35 = vector.shape_cast %34 : vector<1x8x128xbf16> to vector<8x128xbf16>
    %36 = vector.shape_cast %33 : vector<8x128xbf16> to vector<1x8x128xbf16>
    tpu.vector_store %arg11[%c0_16, %c0_17, %c0_18], %36 {strides = array<i32>} : memref<1x8x128xbf16, #tpu.memory_space<vmem>>, vector<1x8x128xbf16>,
    %c0_19 = arith.constant 0 : index
    %c0_20 = arith.constant 0 : index
    %37 = vector.load %arg7[%c0_19, %c0_20] : memref<128x128xbf16, #tpu.memory_space<vmem>>, vector<128x128xbf16>
    %cst_21 = arith.constant dense<0.000000e+00> : vector<8x128xf32>
    %38 = tpu.matmul %25, %37, %cst_21 {dimension_numbers = #tpu.dot_dimension_numbers<[1], [0], [0], [1], [0, 0, 1, 1], [], []>} : vector<8x128xbf16>, vector<128x128xbf16>, vector<8x128xf32> -> vector<8x128xf32>
    %c0_22 = arith.constant 0 : index
    %c0_23 = arith.constant 0 : index
    %39 = vector.load %arg8[%c0_22, %c0_23] : memref<1x128xf32, #tpu.memory_space<vmem>>, vector<1x128xf32>
    %40 = vector.broadcast %39 : vector<1x128xf32> to vector<8x128xf32>
    %41 = arith.addf %38, %40 : vector<8x128xf32>
    %42 = arith.truncf %41 : vector<8x128xf32> to vector<8x128xbf16>
    %c0_24 = arith.constant 0 : index
    %c0_25 = arith.constant 0 : index
    %c0_26 = arith.constant 0 : index
    %43 = vector.load %arg12[%c0_24, %c0_25, %c0_26] : memref<1x8x128xbf16, #tpu.memory_space<vmem>>, vector<1x8x128xbf16>
    %44 = vector.shape_cast %43 : vector<1x8x128xbf16> to vector<8x128xbf16>
    %45 = vector.shape_cast %42 : vector<8x128xbf16> to vector<1x8x128xbf16>
    tpu.vector_store %arg12[%c0_24, %c0_25, %c0_26], %45 {strides = array<i32>} : memref<1x8x128xbf16, #tpu.memory_space<vmem>>, vector<1x8x128xbf16>,
    %c0_27 = arith.constant 0 : index
    %c0_28 = arith.constant 0 : index
    %46 = vector.load %arg9[%c0_27, %c0_28] : memref<128x128xbf16, #tpu.memory_space<vmem>>, vector<128x128xbf16>
    %cst_29 = arith.constant dense<0.000000e+00> : vector<8x128xf32>
    %47 = tpu.matmul %25, %46, %cst_29 {dimension_numbers = #tpu.dot_dimension_numbers<[1], [0], [0], [1], [0, 0, 1, 1], [], []>} : vector<8x128xbf16>, vector<128x128xbf16>, vector<8x128xf32> -> vector<8x128xf32>
    %c0_30 = arith.constant 0 : index
    %c0_31 = arith.constant 0 : index
    %48 = vector.load %arg10[%c0_30, %c0_31] : memref<1x128xf32, #tpu.memory_space<vmem>>, vector<1x128xf32>
    %49 = vector.broadcast %48 : vector<1x128xf32> to vector<8x128xf32>
    %50 = arith.addf %47, %49 : vector<8x128xf32>
    %51 = arith.truncf %50 : vector<8x128xf32> to vector<8x128xbf16>
    %c0_32 = arith.constant 0 : index
    %c0_33 = arith.constant 0 : index
    %c0_34 = arith.constant 0 : index
    %52 = vector.load %arg13[%c0_32, %c0_33, %c0_34] : memref<1x8x128xbf16, #tpu.memory_space<vmem>>, vector<1x8x128xbf16>
    %53 = vector.shape_cast %52 : vector<1x8x128xbf16> to vector<8x128xbf16>
    %54 = vector.shape_cast %51 : vector<8x128xbf16> to vector<1x8x128xbf16>
    tpu.vector_store %arg13[%c0_32, %c0_33, %c0_34], %54 {strides = array<i32>} : memref<1x8x128xbf16, #tpu.memory_space<vmem>>, vector<1x8x128xbf16>,
    return
  }
  func.func @transform_0(%arg0: i32, %arg1: i32) -> (i32, i32, i32) {
    %c0_i32 = arith.constant 0 : i32
    %c0_i32_0 = arith.constant 0 : i32
    return %arg0, %arg1, %c0_i32 : i32, i32, i32
  }
  func.func @transform_1(%arg0: i32, %arg1: i32) -> (i32, i32) {
    %c0_i32 = arith.constant 0 : i32
    %c0_i32_0 = arith.constant 0 : i32
    %c0_i32_1 = arith.constant 0 : i32
    return %c0_i32, %c0_i32_0 : i32, i32
  }
  func.func @transform_2(%arg0: i32, %arg1: i32) -> (i32, i32) {
    %c0_i32 = arith.constant 0 : i32
    %c0_i32_0 = arith.constant 0 : i32
    %c0_i32_1 = arith.constant 0 : i32
    return %c0_i32, %c0_i32_0 : i32, i32
  }
  func.func @transform_3(%arg0: i32, %arg1: i32) -> (i32, i32) {
    %c0_i32 = arith.constant 0 : i32
    %c0_i32_0 = arith.constant 0 : i32
    %c0_i32_1 = arith.constant 0 : i32
    return %c0_i32, %c0_i32_0 : i32, i32
  }
  func.func @transform_4(%arg0: i32, %arg1: i32) -> (i32, i32) {
    %c0_i32 = arith.constant 0 : i32
    %c0_i32_0 = arith.constant 0 : i32
    %c0_i32_1 = arith.constant 0 : i32
    return %c0_i32, %c0_i32_0 : i32, i32
  }
  func.func @transform_5(%arg0: i32, %arg1: i32) -> (i32, i32) {
    %c0_i32 = arith.constant 0 : i32
    %c0_i32_0 = arith.constant 0 : i32
    %c0_i32_1 = arith.constant 0 : i32
    return %c0_i32, %c0_i32_0 : i32, i32
  }
  func.func @transform_6(%arg0: i32, %arg1: i32) -> (i32, i32) {
    %c0_i32 = arith.constant 0 : i32
    %c0_i32_0 = arith.constant 0 : i32
    %c0_i32_1 = arith.constant 0 : i32
    return %c0_i32, %c0_i32_0 : i32, i32
  }
  func.func @transform_7(%arg0: i32, %arg1: i32) -> (i32, i32) {
    %c0_i32 = arith.constant 0 : i32
    %c0_i32_0 = arith.constant 0 : i32
    %c0_i32_1 = arith.constant 0 : i32
    return %c0_i32, %c0_i32_0 : i32, i32
  }
  func.func @transform_8(%arg0: i32, %arg1: i32) -> (i32, i32) {
    %c0_i32 = arith.constant 0 : i32
    %c0_i32_0 = arith.constant 0 : i32
    %c0_i32_1 = arith.constant 0 : i32
    return %c0_i32, %c0_i32_0 : i32, i32
  }
  func.func @transform_9(%arg0: i32, %arg1: i32) -> (i32, i32, i32) {
    %c0_i32 = arith.constant 0 : i32
    %c0_i32_0 = arith.constant 0 : i32
    return %arg0, %arg1, %c0_i32 : i32, i32, i32
  }
  func.func @transform_10(%arg0: i32, %arg1: i32) -> (i32, i32, i32) {
    %c0_i32 = arith.constant 0 : i32
    %c0_i32_0 = arith.constant 0 : i32
    return %arg0, %arg1, %c0_i32 : i32, i32, i32
  }
  func.func @transform_11(%arg0: i32, %arg1: i32) -> (i32, i32, i32) {
    %c0_i32 = arith.constant 0 : i32
    %c0_i32_0 = arith.constant 0 : i32
    return %arg0, %arg1, %c0_i32 : i32, i32, i32
  }
}

</mosaic_0001>

<llo_original>
// kernel: tpu_custom_call.1
$region0: #{tpu_custom_call.1}
  #allocation0 [shape = 'u32[]', space=smem, size = 0x4, offset = 0x4, fixed_abs, tag = 'smem constant byte address 0x4 - core index']
  #allocation1 [shape = 'u32[144,128]{1,0:T(1,128)}', space=vmem, size = 0x12000, scoped, tag = 'internal scratch']
  %s0 = inlined_call_operand.hbm [shape: f32[2,8,128], index: 0, kind: input, shape index: {}]
  %s1 = inlined_call_operand.vmem [shape: f32[1,128], index: 1, kind: input, shape index: {}]
  %s2 = inlined_call_operand.vmem [shape: f32[1,128], index: 2, kind: input, shape index: {}]
  %s3 = inlined_call_operand.hbm [shape: bf16[128,128], index: 3, kind: input, shape index: {}]
  %s4 = inlined_call_operand.vmem [shape: f32[1,128], index: 4, kind: input, shape index: {}]
  %s5 = inlined_call_operand.hbm [shape: bf16[128,128], index: 5, kind: input, shape index: {}]
  %s6 = inlined_call_operand.vmem [shape: f32[1,128], index: 6, kind: input, shape index: {}]
  %s7 = inlined_call_operand.hbm [shape: bf16[128,128], index: 7, kind: input, shape index: {}]
  %s8 = inlined_call_operand.vmem [shape: f32[1,128], index: 8, kind: input, shape index: {}]
  %s9 = inlined_call_operand.hbm [shape: bf16[2,8,128], index: 9, kind: output, shape index: {0}]
  %s10 = inlined_call_operand.hbm [shape: bf16[2,8,128], index: 10, kind: output, shape index: {1}]
  %s11 = inlined_call_operand.hbm [shape: bf16[2,8,128], index: 11, kind: output, shape index: {2}]
  %12 = xla_tuple %s9, %s10, %s11
  %s13 = sld [smem:[#allocation0]]
  $region101: #{tpu_custom_call.1} parent=0
    _
  %s15 = ssub.s32 1, %s13
  %s16 = scalar_select 0, %s15, %s13
  $region1: #{tpu_custom_call.1} parent=0
    #allocation2 [shape = 'u8[8192]{0}', space=vmem, size = 0x2000, scoped, tag = 'input window, operand 0']
    #allocation3 [shape = 's32[2]{0}', space=sflag, size = 0x8, scoped, tag = 'scoped memory for tpu_custom_call.1']
    #allocation4 [shape = 's32[2]{0}', space=sflag, size = 0x8, scoped, tag = 'scoped memory for tpu_custom_call.1']
    #allocation5 [shape = 'u8[32768]{0}', space=vmem, size = 0x8000, scoped, tag = 'input window, operand 3, single buffered']
    #allocation6 [shape = 's32[1]{0}', space=sflag, size = 0x4, scoped, tag = 'scoped memory for tpu_custom_call.1']
    #allocation7 [shape = 'u8[32768]{0}', space=vmem, size = 0x8000, scoped, tag = 'input window, operand 5, single buffered']
    #allocation8 [shape = 'u8[32768]{0}', space=vmem, size = 0x8000, scoped, tag = 'input window, operand 7, single buffered']
    #allocation9 [shape = 's32[1]{0}', space=sflag, size = 0x4, scoped, tag = 'scoped memory for tpu_custom_call.1']
    #allocation10 [shape = 'u8[4096]{0}', space=vmem, size = 0x1000, scoped, tag = 'output window, operand 0']
    #allocation11 [shape = 'u8[4096]{0}', space=vmem, size = 0x1000, scoped, tag = 'output window, operand 1']
    #allocation12 [shape = 's32[2]{0}', space=sflag, size = 0x8, scoped, tag = 'scoped memory for tpu_custom_call.1']
    #allocation13 [shape = 'u8[4096]{0}', space=vmem, size = 0x1000, scoped, tag = 'output window, operand 2']
    %17 = vsyncpa [#allocation3], 0
    %s18 = scalar_lea.sflag [#allocation3], 1
    %19 = vsyncpa %s18, 0
    %20 = vsyncpa [#allocation6], 0
    %21 = vsyncpa [#allocation9], 0
    %22 = vsyncpa [#allocation4], 0
    %s23 = scalar_lea.sflag [#allocation4], 1
    %24 = vsyncpa %s23, 0
    %25 = vsyncpa [#allocation12], 0
    %s26 = scalar_lea.sflag [#allocation12], 1
    %27 = vsyncpa %s26, 0
    loop: start=0, step=1, limit=4
    $region2: #{tpu_custom_call.1} parent=1 // loop_pre_header
      _
    $region3: #{tpu_custom_call.1} parent=1 // loop_header
      %s29 = sphi 0, %s33
      %p30 = scmp.ge.s32.totalorder %s29, 4
      %s36 = sphi 0, %s48
      %s37 = sphi 0, %s44
      %s38 = sphi 0, %s36
      %s39 = sphi 0, %s37
      %s40 = sphi 0, %s38
      %s41 = sphi 0, %s39
      %s53 = sphi 0, %s55
      %s56 = sphi 0, %s53
      %s57 = sphi 0, %s56
      %s73 = sphi 0, %s57
      %s77 = sphi 0, %s77
      %s79 = sphi 0, %s77
      %s80 = sphi 0, %s79
      %s94 = sphi 0, %s80
      %s98 = sphi 0, %s98
      %s100 = sphi 0, %s98
      %s101 = sphi 0, %s100
      %s115 = sphi 0, %s101
      %s119 = sphi 0, %s119
      %s121 = sphi 0, %s119
      %s122 = sphi 0, %s121
      %s136 = sphi 0, %s122
      %s140 = sphi 0, %s140
      %s142 = sphi 0, %s140
      %s143 = sphi 0, %s142
      %s157 = sphi 0, %s143
      %s161 = sphi 0, %s161
      %s163 = sphi 0, %s161
      %s164 = sphi 0, %s163
      %s178 = sphi 0, %s164
      %s182 = sphi 0, %s182
      %s184 = sphi 0, %s182
      %s185 = sphi 0, %s184
      %s199 = sphi 0, %s185
      %s203 = sphi 0, %s203
      %s205 = sphi 0, %s203
      %s206 = sphi 0, %s205
      %s220 = sphi 0, %s206
      %s224 = sphi 0, %s224
      %s226 = sphi 0, %s224
      %s227 = sphi 0, %s226
      %s241 = sphi 0, %s227
      %s249 = sphi 0, %s251
      %s252 = sphi 0, %s249
      %s253 = sphi 0, %s252
      %s269 = sphi 0, %s253
      %s277 = sphi 0, %s279
      %s280 = sphi 0, %s277
      %s281 = sphi 0, %s280
      %s297 = sphi 0, %s281
      %s305 = sphi 0, %s307
      %s308 = sphi 0, %s305
      %s309 = sphi 0, %s308
      %s325 = sphi 0, %s309
    $region4: #{tpu_custom_call.1} parent=1 // loop_header_branch
      %32 = sbr.rel (%p30) target = $region8
    $region5: #{tpu_custom_call.1} parent=1 // loop_body
      %s34 = ssub.s32 %s29, 1
      %s35 = ssub.s32 %s29, 2
      %s42 = sadd.s32 1, %s37
      %p43 = scmp.ge.s32.totalorder %s42, 1
      %s44 = scalar_select %p43, 0, %s42
      %s45 = sadd.s32 1, %s36
      %s46 = scalar_select %p43, %s45, %s36
      %p47 = scmp.ge.s32.totalorder %s46, 2
      %s48 = scalar_select %p47, 0, %s46
      %s49 = ssub.s32 %s36, %s48
      %s50 = ssub.s32 %s37, %s44
      %s51 = sor.u32 %s49, %s50
      %p52 = scmp.eq.s32.totalorder %s51, 0
      %s54 = sadd.s32 %s53, 1
      %s55 = scalar_select %p52, %s53, %s54
      %p58 = pneg %p52
      %p59 = scmp.eq.s32.totalorder %s29, 1
      %p60 = por %p58, %p59
      %p61 = scmp.ne.s32.totalorder %s53, %s56
      %p62 = scmp.eq.s32.totalorder %s29, 0
      %p63 = por %p61, %p62
      %p64 = scmp.ne.s32.totalorder %s53, %s56
      %p65 = scmp.eq.s32.totalorder %s34, 1
      %p66 = por %p64, %p65
      %p67 = scmp.ne.s32.totalorder %s56, %s57
      %p68 = scmp.eq.s32.totalorder %s34, 0
      %p69 = por %p67, %p68
      %p70 = scmp.ne.s32.totalorder %s56, %s57
      %p71 = scmp.eq.s32.totalorder %s35, 1
      %p72 = por %p70, %p71
      %p74 = scmp.ne.s32.totalorder %s57, %s73
      %p75 = scmp.eq.s32.totalorder %s35, 0
      %p76 = por %p74, %p75
      %s78 = sadd.s32 %s77, 1
      %p81 = scmp.eq.s32.totalorder %s29, 1
      %p82 = scmp.ne.s32.totalorder %s77, %s79
      %p83 = scmp.eq.s32.totalorder %s29, 0
      %p84 = por %p82, %p83
      %p85 = scmp.ne.s32.totalorder %s77, %s79
      %p86 = scmp.eq.s32.totalorder %s34, 1
      %p87 = por %p85, %p86
      %p88 = scmp.ne.s32.totalorder %s79, %s80
      %p89 = scmp.eq.s32.totalorder %s34, 0
      %p90 = por %p88, %p89
      %p91 = scmp.ne.s32.totalorder %s79, %s80
      %p92 = scmp.eq.s32.totalorder %s35, 1
      %p93 = por %p91, %p92
      %p95 = scmp.ne.s32.totalorder %s80, %s94
      %p96 = scmp.eq.s32.totalorder %s35, 0
      %p97 = por %p95, %p96
      %s99 = sadd.s32 %s98, 1
      %p102 = scmp.eq.s32.totalorder %s29, 1
      %p103 = scmp.ne.s32.totalorder %s98, %s100
      %p104 = scmp.eq.s32.totalorder %s29, 0
      %p105 = por %p103, %p104
      %p106 = scmp.ne.s32.totalorder %s98, %s100
      %p107 = scmp.eq.s32.totalorder %s34, 1
      %p108 = por %p106, %p107
      %p109 = scmp.ne.s32.totalorder %s100, %s101
      %p110 = scmp.eq.s32.totalorder %s34, 0
      %p111 = por %p109, %p110
      %p112 = scmp.ne.s32.totalorder %s100, %s101
      %p113 = scmp.eq.s32.totalorder %s35, 1
      %p114 = por %p112, %p113
      %p116 = scmp.ne.s32.totalorder %s101, %s115
      %p117 = scmp.eq.s32.totalorder %s35, 0
      %p118 = por %p116, %p117
      %s120 = sadd.s32 %s119, 1
      %p123 = scmp.eq.s32.totalorder %s29, 1
      %p124 = scmp.ne.s32.totalorder %s119, %s121
      %p125 = scmp.eq.s32.totalorder %s29, 0
      %p126 = por %p124, %p125
      %p127 = scmp.ne.s32.totalorder %s119, %s121
      %p128 = scmp.eq.s32.totalorder %s34, 1
      %p129 = por %p127, %p128
      %p130 = scmp.ne.s32.totalorder %s121, %s122
      %p131 = scmp.eq.s32.totalorder %s34, 0
      %p132 = por %p130, %p131
      %p133 = scmp.ne.s32.totalorder %s121, %s122
      %p134 = scmp.eq.s32.totalorder %s35, 1
      %p135 = por %p133, %p134
      %p137 = scmp.ne.s32.totalorder %s122, %s136
      %p138 = scmp.eq.s32.totalorder %s35, 0
      %p139 = por %p137, %p138
      %s141 = sadd.s32 %s140, 1
      %p144 = scmp.eq.s32.totalorder %s29, 1
      %p145 = scmp.ne.s32.totalorder %s140, %s142
      %p146 = scmp.eq.s32.totalorder %s29, 0
      %p147 = por %p145, %p146
      %p148 = scmp.ne.s32.totalorder %s140, %s142
      %p149 = scmp.eq.s32.totalorder %s34, 1
      %p150 = por %p148, %p149
      %p151 = scmp.ne.s32.totalorder %s142, %s143
      %p152 = scmp.eq.s32.totalorder %s34, 0
      %p153 = por %p151, %p152
      %p154 = scmp.ne.s32.totalorder %s142, %s143
      %p155 = scmp.eq.s32.totalorder %s35, 1
      %p156 = por %p154, %p155
      %p158 = scmp.ne.s32.totalorder %s143, %s157
      %p159 = scmp.eq.s32.totalorder %s35, 0
      %p160 = por %p158, %p159
      %s162 = sadd.s32 %s161, 1
      %p165 = scmp.eq.s32.totalorder %s29, 1
      %p166 = scmp.ne.s32.totalorder %s161, %s163
      %p167 = scmp.eq.s32.totalorder %s29, 0
      %p168 = por %p166, %p167
      %p169 = scmp.ne.s32.totalorder %s161, %s163
      %p170 = scmp.eq.s32.totalorder %s34, 1
      %p171 = por %p169, %p170
      %p172 = scmp.ne.s32.totalorder %s163, %s164
      %p173 = scmp.eq.s32.totalorder %s34, 0
      %p174 = por %p172, %p173
      %p175 = scmp.ne.s32.totalorder %s163, %s164
      %p176 = scmp.eq.s32.totalorder %s35, 1
      %p177 = por %p175, %p176
      %p179 = scmp.ne.s32.totalorder %s164, %s178
      %p180 = scmp.eq.s32.totalorder %s35, 0
      %p181 = por %p179, %p180
      %s183 = sadd.s32 %s182, 1
      %p186 = scmp.eq.s32.totalorder %s29, 1
      %p187 = scmp.ne.s32.totalorder %s182, %s184
      %p188 = scmp.eq.s32.totalorder %s29, 0
      %p189 = por %p187, %p188
      %p190 = scmp.ne.s32.totalorder %s182, %s184
      %p191 = scmp.eq.s32.totalorder %s34, 1
      %p192 = por %p190, %p191
      %p193 = scmp.ne.s32.totalorder %s184, %s185
      %p194 = scmp.eq.s32.totalorder %s34, 0
      %p195 = por %p193, %p194
      %p196 = scmp.ne.s32.totalorder %s184, %s185
      %p197 = scmp.eq.s32.totalorder %s35, 1
      %p198 = por %p196, %p197
      %p200 = scmp.ne.s32.totalorder %s185, %s199
      %p201 = scmp.eq.s32.totalorder %s35, 0
      %p202 = por %p200, %p201
      %s204 = sadd.s32 %s203, 1
      %p207 = scmp.eq.s32.totalorder %s29, 1
      %p208 = scmp.ne.s32.totalorder %s203, %s205
      %p209 = scmp.eq.s32.totalorder %s29, 0
      %p210 = por %p208, %p209
      %p211 = scmp.ne.s32.totalorder %s203, %s205
      %p212 = scmp.eq.s32.totalorder %s34, 1
      %p213 = por %p211, %p212
      %p214 = scmp.ne.s32.totalorder %s205, %s206
      %p215 = scmp.eq.s32.totalorder %s34, 0
      %p216 = por %p214, %p215
      %p217 = scmp.ne.s32.totalorder %s205, %s206
      %p218 = scmp.eq.s32.totalorder %s35, 1
      %p219 = por %p217, %p218
      %p221 = scmp.ne.s32.totalorder %s206, %s220
      %p222 = scmp.eq.s32.totalorder %s35, 0
      %p223 = por %p221, %p222
      %s225 = sadd.s32 %s224, 1
      %p228 = scmp.eq.s32.totalorder %s29, 1
      %p229 = scmp.ne.s32.totalorder %s224, %s226
      %p230 = scmp.eq.s32.totalorder %s29, 0
      %p231 = por %p229, %p230
      %p232 = scmp.ne.s32.totalorder %s224, %s226
      %p233 = scmp.eq.s32.totalorder %s34, 1
      %p234 = por %p232, %p233
      %p235 = scmp.ne.s32.totalorder %s226, %s227
      %p236 = scmp.eq.s32.totalorder %s34, 0
      %p237 = por %p235, %p236
      %p238 = scmp.ne.s32.totalorder %s226, %s227
      %p239 = scmp.eq.s32.totalorder %s35, 1
      %p240 = por %p238, %p239
      %p242 = scmp.ne.s32.totalorder %s227, %s241
      %p243 = scmp.eq.s32.totalorder %s35, 0
      %p244 = por %p242, %p243
      %s245 = ssub.s32 %s36, %s48
      %s246 = ssub.s32 %s37, %s44
      %s247 = sor.u32 %s245, %s246
      %p248 = scmp.eq.s32.totalorder %s247, 0
      %s250 = sadd.s32 %s249, 1
      %s251 = scalar_select %p248, %s249, %s250
      %p254 = pneg %p248
      %p255 = scmp.eq.s32.totalorder %s29, 1
      %p256 = por %p254, %p255
      %p257 = scmp.ne.s32.totalorder %s249, %s252
      %p258 = scmp.eq.s32.totalorder %s29, 0
      %p259 = por %p257, %p258
      %p260 = scmp.ne.s32.totalorder %s249, %s252
      %p261 = scmp.eq.s32.totalorder %s34, 1
      %p262 = por %p260, %p261
      %p263 = scmp.ne.s32.totalorder %s252, %s253
      %p264 = scmp.eq.s32.totalorder %s34, 0
      %p265 = por %p263, %p264
      %p266 = scmp.ne.s32.totalorder %s252, %s253
      %p267 = scmp.eq.s32.totalorder %s35, 1
      %p268 = por %p266, %p267
      %p270 = scmp.ne.s32.totalorder %s253, %s269
      %p271 = scmp.eq.s32.totalorder %s35, 0
      %p272 = por %p270, %p271
      %s273 = ssub.s32 %s36, %s48
      %s274 = ssub.s32 %s37, %s44
      %s275 = sor.u32 %s273, %s274
      %p276 = scmp.eq.s32.totalorder %s275, 0
      %s278 = sadd.s32 %s277, 1
      %s279 = scalar_select %p276, %s277, %s278
      %p282 = pneg %p276
      %p283 = scmp.eq.s32.totalorder %s29, 1
      %p284 = por %p282, %p283
      %p285 = scmp.ne.s32.totalorder %s277, %s280
      %p286 = scmp.eq.s32.totalorder %s29, 0
      %p287 = por %p285, %p286
      %p288 = scmp.ne.s32.totalorder %s277, %s280
      %p289 = scmp.eq.s32.totalorder %s34, 1
      %p290 = por %p288, %p289
      %p291 = scmp.ne.s32.totalorder %s280, %s281
      %p292 = scmp.eq.s32.totalorder %s34, 0
      %p293 = por %p291, %p292
      %p294 = scmp.ne.s32.totalorder %s280, %s281
      %p295 = scmp.eq.s32.totalorder %s35, 1
      %p296 = por %p294, %p295
      %p298 = scmp.ne.s32.totalorder %s281, %s297
      %p299 = scmp.eq.s32.totalorder %s35, 0
      %p300 = por %p298, %p299
      %s301 = ssub.s32 %s36, %s48
      %s302 = ssub.s32 %s37, %s44
      %s303 = sor.u32 %s301, %s302
      %p304 = scmp.eq.s32.totalorder %s303, 0
      %s306 = sadd.s32 %s305, 1
      %s307 = scalar_select %p304, %s305, %s306
      %p310 = pneg %p304
      %p311 = scmp.eq.s32.totalorder %s29, 1
      %p312 = por %p310, %p311
      %p313 = scmp.ne.s32.totalorder %s305, %s308
      %p314 = scmp.eq.s32.totalorder %s29, 0
      %p315 = por %p313, %p314
      %p316 = scmp.ne.s32.totalorder %s305, %s308
      %p317 = scmp.eq.s32.totalorder %s34, 1
      %p318 = por %p316, %p317
      %p319 = scmp.ne.s32.totalorder %s308, %s309
      %p320 = scmp.eq.s32.totalorder %s34, 0
      %p321 = por %p319, %p320
      %p322 = scmp.ne.s32.totalorder %s308, %s309
      %p323 = scmp.eq.s32.totalorder %s35, 1
      %p324 = por %p322, %p323
      %p326 = scmp.ne.s32.totalorder %s309, %s325
      %p327 = scmp.eq.s32.totalorder %s35, 0
      %p328 = por %p326, %p327
      %p329 = scmp.le.s32.totalorder 1, %s29
      %p330 = scmp.lt.s32.totalorder %s29, 3
      %p331 = pnand %p329, %p330
      %p332 = pneg %p331
      // Predicated region
      $region9: #{tpu_custom_call.1} parent=5 // pred_check
        _
      $region10: #{tpu_custom_call.1} parent=5 // pred_check_branch
        %334 = sbr.rel (%p331) target = $region12
      $region11: #{tpu_custom_call.1} parent=5 // pred_region
        %s335 = ssub.s32 %s29, 1
        // Predicated region
        $region13: #{tpu_custom_call.1} parent=11 // pred_check
          %p336 = pneg %p90
        $region14: #{tpu_custom_call.1} parent=11 // pred_check_branch
          %338 = sbr.rel (%p336) target = $region16
        $region15: #{tpu_custom_call.1} parent=11 // pred_region
          _
        $region16: #{tpu_custom_call.1} parent=11 // pred_fallthru
          _
        // Predicated region
        $region17: #{tpu_custom_call.1} parent=11 // pred_check
          %p339 = pneg %p111
        $region18: #{tpu_custom_call.1} parent=11 // pred_check_branch
          %341 = sbr.rel (%p339) target = $region20
        $region19: #{tpu_custom_call.1} parent=11 // pred_region
          _
        $region20: #{tpu_custom_call.1} parent=11 // pred_fallthru
          _
        // Predicated region
        $region21: #{tpu_custom_call.1} parent=11 // pred_check
          %p342 = pneg %p132
        $region22: #{tpu_custom_call.1} parent=11 // pred_check_branch
          %344 = sbr.rel (%p342) target = $region24
        $region23: #{tpu_custom_call.1} parent=11 // pred_region
          %s346 = ssub.s32 1024, 1024
          %347 = vsyncadd [#allocation6], %s346
          %s348 = sshll.u32 [#allocation5], 4
          %s349 = int_to_ptr.vmem [resolvable:$true] %s348
          %354 = dma.hbm_to_vmem [thread:$0]  %s3, 1024, %s349, [#allocation6], 64, 64, 4
        $region24: #{tpu_custom_call.1} parent=11 // pred_fallthru
          _
        // Predicated region
        $region25: #{tpu_custom_call.1} parent=11 // pred_check
          %p355 = pneg %p153
        $region26: #{tpu_custom_call.1} parent=11 // pred_check_branch
          %357 = sbr.rel (%p355) target = $region28
        $region27: #{tpu_custom_call.1} parent=11 // pred_region
          _
        $region28: #{tpu_custom_call.1} parent=11 // pred_fallthru
          _
        // Predicated region
        $region29: #{tpu_custom_call.1} parent=11 // pred_check
          %p358 = pneg %p174
        $region30: #{tpu_custom_call.1} parent=11 // pred_check_branch
          %360 = sbr.rel (%p358) target = $region32
        $region31: #{tpu_custom_call.1} parent=11 // pred_region
          %s362 = ssub.s32 1024, 1024
          %363 = vsyncadd [#allocation6], %s362
          %s364 = sshll.u32 [#allocation7], 4
          %s365 = int_to_ptr.vmem [resolvable:$true] %s364
          %370 = dma.hbm_to_vmem [thread:$0]  %s5, 1024, %s365, [#allocation6], 64, 64, 4
        $region32: #{tpu_custom_call.1} parent=11 // pred_fallthru
          _
        // Predicated region
        $region33: #{tpu_custom_call.1} parent=11 // pred_check
          %p371 = pneg %p195
        $region34: #{tpu_custom_call.1} parent=11 // pred_check_branch
          %373 = sbr.rel (%p371) target = $region36
        $region35: #{tpu_custom_call.1} parent=11 // pred_region
          _
        $region36: #{tpu_custom_call.1} parent=11 // pred_fallthru
          _
        // Predicated region
        $region37: #{tpu_custom_call.1} parent=11 // pred_check
          %p374 = pneg %p216
        $region38: #{tpu_custom_call.1} parent=11 // pred_check_branch
          %376 = sbr.rel (%p374) target = $region40
        $region39: #{tpu_custom_call.1} parent=11 // pred_region
          %s378 = ssub.s32 1024, 1024
          %379 = vsyncadd [#allocation9], %s378
          %s380 = sshll.u32 [#allocation8], 4
          %s381 = int_to_ptr.vmem [resolvable:$true] %s380
          %386 = dma.hbm_to_vmem [thread:$0]  %s7, 1024, %s381, [#allocation9], 64, 64, 4
        $region40: #{tpu_custom_call.1} parent=11 // pred_fallthru
          _
        // Predicated region
        $region41: #{tpu_custom_call.1} parent=11 // pred_check
          %p387 = pneg %p237
        $region42: #{tpu_custom_call.1} parent=11 // pred_check_branch
          %389 = sbr.rel (%p387) target = $region44
        $region43: #{tpu_custom_call.1} parent=11 // pred_region
          _
        $region44: #{tpu_custom_call.1} parent=11 // pred_fallthru
          _
      $region12: #{tpu_custom_call.1} parent=5 // pred_fallthru
        _
      %p390 = scmp.lt.s32.totalorder %s29, 2
      // Predicated region
      $region45: #{tpu_custom_call.1} parent=5 // pred_check
        %p391 = pneg %p390
      $region46: #{tpu_custom_call.1} parent=5 // pred_check_branch
        %393 = sbr.rel (%p391) target = $region48
      $region47: #{tpu_custom_call.1} parent=5 // pred_region
        // Predicated region
        $region49: #{tpu_custom_call.1} parent=47 // pred_check
          %p394 = pneg %p63
        $region50: #{tpu_custom_call.1} parent=47 // pred_check_branch
          %396 = sbr.rel (%p394) target = $region52
        $region51: #{tpu_custom_call.1} parent=47 // pred_region
          %s397 = sand.u32 %s53, 1
          %s398 = scalar_lea.sflag [#allocation3], %s397
          %s399 = sand.u32 %s53, 1
          %s400 = smul.addr %s399, 8
          %s401 = scalar_lea.vmem [#allocation2], %s400
          %s403 = ssub.s32 128, 128
          %404 = vsyncadd %s398, %s403
          %s405 = sadd.s32 %s37, %s36
          %s406 = smul.addr %s405, 128
          %s407 = scalar_lea.hbm %s0, %s406
          %s409 = sshll.u32 %s401, 4
          %s410 = int_to_ptr.vmem [resolvable:$true] %s409
          %412 = dma.hbm_to_vmem [thread:$0]  %s407, 128, %s410, %s398
        $region52: #{tpu_custom_call.1} parent=47 // pred_fallthru
          _
      $region48: #{tpu_custom_call.1} parent=5 // pred_fallthru
        _
      %p413 = scmp.le.s32.totalorder 1, %s29
      %p414 = scmp.lt.s32.totalorder %s29, 3
      %p415 = pnand %p413, %p414
      %p416 = pneg %p415
      // Predicated region
      $region53: #{tpu_custom_call.1} parent=5 // pred_check
        _
      $region54: #{tpu_custom_call.1} parent=5 // pred_check_branch
        %418 = sbr.rel (%p415) target = $region56
      $region55: #{tpu_custom_call.1} parent=5 // pred_region
        %s419 = ssub.s32 %s29, 1
        %s420 = sand.u32 %s56, 1
        %s421 = scalar_lea.sflag [#allocation3], %s420
        %s422 = sand.u32 %s56, 1
        %s423 = smul.addr %s422, 8
        %s424 = scalar_lea.vmem [#allocation2], %s423
        // Predicated region
        $region57: #{tpu_custom_call.1} parent=55 // pred_check
          %p425 = pneg %p69
        $region58: #{tpu_custom_call.1} parent=55 // pred_check_branch
          %427 = sbr.rel (%p425) target = $region60
        $region59: #{tpu_custom_call.1} parent=55 // pred_region
          %428 = dma.done %s421, 128
        $region60: #{tpu_custom_call.1} parent=55 // pred_fallthru
          _
        // Predicated region
        $region61: #{tpu_custom_call.1} parent=55 // pred_check
          %p429 = pneg %p132
        $region62: #{tpu_custom_call.1} parent=55 // pred_check_branch
          %431 = sbr.rel (%p429) target = $region64
        $region63: #{tpu_custom_call.1} parent=55 // pred_region
          %432 = dma.done [#allocation6], 1024
        $region64: #{tpu_custom_call.1} parent=55 // pred_fallthru
          _
        // Predicated region
        $region65: #{tpu_custom_call.1} parent=55 // pred_check
          %p433 = pneg %p174
        $region66: #{tpu_custom_call.1} parent=55 // pred_check_branch
          %435 = sbr.rel (%p433) target = $region68
        $region67: #{tpu_custom_call.1} parent=55 // pred_region
          %436 = dma.done [#allocation6], 1024
        $region68: #{tpu_custom_call.1} parent=55 // pred_fallthru
          _
        // Predicated region
        $region69: #{tpu_custom_call.1} parent=55 // pred_check
          %p437 = pneg %p216
        $region70: #{tpu_custom_call.1} parent=55 // pred_check_branch
          %439 = sbr.rel (%p437) target = $region72
        $region71: #{tpu_custom_call.1} parent=55 // pred_region
          %440 = dma.done [#allocation9], 1024
        $region72: #{tpu_custom_call.1} parent=55 // pred_fallthru
          _
        %s441 = sand.u32 %s56, 1
        %s442 = scalar_lea.sflag [#allocation3], %s441
        %s443 = sand.u32 %s56, 1
        %s444 = smul.addr %s443, 8
        %s445 = scalar_lea.vmem [#allocation2], %s444
        %p446 = pneg %p69
        %p447 = pneg %p66
        %p448 = pneg %p90
        %p449 = pneg %p87
        %p450 = pneg %p111
        %p451 = pneg %p108
        %p452 = pneg %p132
        %p453 = pneg %p129
        %p454 = pneg %p153
        %p455 = pneg %p150
        %p456 = pneg %p174
        %p457 = pneg %p171
        %p458 = pneg %p195
        %p459 = pneg %p192
        %p460 = pneg %p216
        %p461 = pneg %p213
        %p462 = pneg %p237
        %p463 = pneg %p234
        %p464 = pneg %p265
        %p465 = pneg %p262
        %s466 = sand.u32 %s252, 1
        %s467 = scalar_lea.sflag [#allocation4], %s466
        %s468 = sand.u32 %s252, 1
        %s469 = smul.addr %s468, 4
        %s470 = scalar_lea.vmem [#allocation10], %s469
        %p471 = pneg %p293
        %p472 = pneg %p290
        %s473 = sand.u32 %s34, 1
        %s474 = scalar_lea.sflag [#allocation12], %s473
        %s475 = sand.u32 %s280, 1
        %s476 = smul.addr %s475, 4
        %s477 = scalar_lea.vmem [#allocation11], %s476
        %p478 = pneg %p321
        %p479 = pneg %p318
        %s480 = sand.u32 %s34, 1
        %s481 = scalar_lea.sflag [#allocation12], %s480
        %s482 = sand.u32 %s308, 1
        %s483 = smul.addr %s482, 4
        %s484 = scalar_lea.vmem [#allocation13], %s483
        %v486 = vld [vmem:[%s424] sm:$0xff]
        %v487 = vld [vmem:[%s1] sm:$0x1]
        %v488 = vld [vmem:[%s2] sm:$0x1]
        %489 = vadd.xlane.f32.xlu0 %v486
        %v490 = vpop.xlane.xlu0 %489
        %v491 = vrcp.pop 128.0
        %v492 = vmul.f32 %v490, %v491
        %v493 = vsub.f32 %v486, %v492
        %v494 = vmul.f32 %v493, %v493
        %495 = vadd.xlane.f32.xlu0 %v494
        %v496 = vpop.xlane.xlu0 %495
        %v497 = vmul.f32 %v496, 0.007874016
        %v498 = vrsqrt.pop %v497
        %v499 = vmul.f32 %v497, %v498
        %vm500 = vcmp.eq.f32.partialorder %v497, inf
        %v501 = vsel %vm500, %v497, %v499
        %vm502 = vcmp.eq.f32.partialorder %v497, 0.0
        %v503 = vand.u32 %v497, 2147483648
        %v504 = vsel %vm502, %v503, %v501
        %v505 = vadd.f32 %v504, 1e-06
        %v506 = vrcp.pop %v505
        %v507 = vmul.f32 %v493, %v506
        %v509 = vlaneseq
        %v510 = vshrl.u32 %v509, 7
        %v511 = vsub.s32 0, %v510
        %v512 = vrot.slane %v487, %v511
        %v514 = vmul.f32 %v512, %v507
        %v516 = vlaneseq
        %v517 = vshrl.u32 %v516, 7
        %v518 = vsub.s32 0, %v517
        %v519 = vrot.slane %v488, %v518
        %v521 = vadd.f32 %v514, %v519
        %v522 = vpack.c.bf16 %v521, %v521
        %v523 = vld [vmem:[#allocation5] sm:$0xf]
        %v524 = vld [vmem:[#allocation5 + $0x4] sm:$0xf]
        %v525 = vld [vmem:[#allocation5 + $0x8] sm:$0xf]
        %v526 = vld [vmem:[#allocation5 + $0xc] sm:$0xf]
        %v527 = vld [vmem:[#allocation5 + $0x10] sm:$0xf]
        %v528 = vld [vmem:[#allocation5 + $0x14] sm:$0xf]
        %v529 = vld [vmem:[#allocation5 + $0x18] sm:$0xf]
        %v530 = vld [vmem:[#allocation5 + $0x1c] sm:$0xf]
        %v531 = vld [vmem:[#allocation5 + $0x20] sm:$0xf]
        %v532 = vld [vmem:[#allocation5 + $0x24] sm:$0xf]
        %v533 = vld [vmem:[#allocation5 + $0x28] sm:$0xf]
        %v534 = vld [vmem:[#allocation5 + $0x2c] sm:$0xf]
        %v535 = vld [vmem:[#allocation5 + $0x30] sm:$0xf]
        %v536 = vld [vmem:[#allocation5 + $0x34] sm:$0xf]
        %v537 = vld [vmem:[#allocation5 + $0x38] sm:$0xf]
        %v538 = vld [vmem:[#allocation5 + $0x3c] sm:$0xf]
        %v539 = vld [vmem:[%s4] sm:$0x1]
        %v541 = vlaneseq
        %v542 = vshrl.u32 %v541, 7
        %v543 = vsub.s32 0, %v542
        %v544 = vrot.slane %v539, %v543
        %v562 = vunpack.c.l.b16 %v523
        %v563 = vunpack.c.l.b16 %v524
        %v564 = vunpack.c.l.b16 %v525
        %v565 = vunpack.c.l.b16 %v526
        %v566 = vunpack.c.l.b16 %v527
        %v567 = vunpack.c.l.b16 %v528
        %v568 = vunpack.c.l.b16 %v529
        %v569 = vunpack.c.l.b16 %v530
        %v570 = vunpack.c.l.b16 %v531
        %v571 = vunpack.c.l.b16 %v532
        %v572 = vunpack.c.l.b16 %v533
        %v573 = vunpack.c.l.b16 %v534
        %v574 = vunpack.c.l.b16 %v535
        %v575 = vunpack.c.l.b16 %v536
        %v576 = vunpack.c.l.b16 %v537
        %v577 = vunpack.c.l.b16 %v538
        %v578 = vpack.c.b16 %v563, %v562
        %v579 = vpack.c.b16 %v565, %v564
        %v580 = vpack.c.b16 %v567, %v566
        %v581 = vpack.c.b16 %v569, %v568
        %v582 = vpack.c.b16 %v571, %v570
        %v583 = vpack.c.b16 %v573, %v572
        %v584 = vpack.c.b16 %v575, %v574
        %v585 = vpack.c.b16 %v577, %v576
        %594 = vmatprep.subr.bf16.mxu0 0
        %595 = vmatpush1.bf16.msra.mxu0 %v578
        %596 = vmatprep.subr.bf16.mxu0 0
        %597 = vmatpush1.bf16.msra.mxu0 %v579
        %598 = vmatprep.subr.bf16.mxu0 0
        %599 = vmatpush1.bf16.msra.mxu0 %v580
        %600 = vmatprep.subr.bf16.mxu0 0
        %601 = vmatpush1.bf16.msra.mxu0 %v581
        %602 = vmatprep.subr.bf16.mxu0 0
        %603 = vmatpush1.bf16.msra.mxu0 %v582
        %604 = vmatprep.subr.bf16.mxu0 0
        %605 = vmatpush1.bf16.msra.mxu0 %v583
        %606 = vmatprep.subr.bf16.mxu0 0
        %607 = vmatpush1.bf16.msra.mxu0 %v584
        %608 = vmatprep.subr.bf16.mxu0 0
        %609 = vmatpush1.bf16.msra.mxu0 %v585
        %610 = vmatprep.subr.bf16.mxu0 0
        %611 = vmatpush1.bf16.msra.mxu0 0
        %612 = vmatprep.subr.bf16.mxu0 0
        %613 = vmatpush1.bf16.msra.mxu0 0
        %614 = vmatprep.subr.bf16.mxu0 0
        %615 = vmatpush1.bf16.msra.mxu0 0
        %616 = vmatprep.subr.bf16.mxu0 0
        %617 = vmatpush1.bf16.msra.mxu0 0
        %618 = vmatprep.subr.bf16.mxu0 0
        %619 = vmatpush1.bf16.msra.mxu0 0
        %620 = vmatprep.subr.bf16.mxu0 0
        %621 = vmatpush1.bf16.msra.mxu0 0
        %622 = vmatprep.subr.bf16.mxu0 0
        %623 = vmatpush1.bf16.msra.mxu0 0
        %624 = vmatprep.subr.bf16.mxu0 0
        %625 = vmatpush1.bf16.msra.mxu0 0
        %626 = vmatprep.mubr.bf16.mxu0 0
        %627 = vmatmul.mubr.bf16.gmra.mrb[0].mxu0 %v522
        %v628 = vpop.f32.mrb[0].mxu0
        %v629 = vadd.f32 %v544, %v628
        %v630 = vpop.f32.mrb[0].mxu0
        %v631 = vpop.f32.mrb[0].mxu0
        %v632 = vpop.f32.mrb[0].mxu0
        %633 = vdwg.mxu0
        %v634 = vmul.f32 %v629, 0.17677669
        %v635 = vpack.c.bf16 %v634, %v634
        %636 = vst [vmem:[%s470] sm:$0xf] %v635
        %v637 = vld [vmem:[#allocation7] sm:$0xf]
        %v638 = vld [vmem:[#allocation7 + $0x4] sm:$0xf]
        %v639 = vld [vmem:[#allocation7 + $0x8] sm:$0xf]
        %v640 = vld [vmem:[#allocation7 + $0xc] sm:$0xf]
        %v641 = vld [vmem:[#allocation7 + $0x10] sm:$0xf]
        %v642 = vld [vmem:[#allocation7 + $0x14] sm:$0xf]
        %v643 = vld [vmem:[#allocation7 + $0x18] sm:$0xf]
        %v644 = vld [vmem:[#allocation7 + $0x1c] sm:$0xf]
        %v645 = vld [vmem:[#allocation7 + $0x20] sm:$0xf]
        %v646 = vld [vmem:[#allocation7 + $0x24] sm:$0xf]
        %v647 = vld [vmem:[#allocation7 + $0x28] sm:$0xf]
        %v648 = vld [vmem:[#allocation7 + $0x2c] sm:$0xf]
        %v649 = vld [vmem:[#allocation7 + $0x30] sm:$0xf]
        %v650 = vld [vmem:[#allocation7 + $0x34] sm:$0xf]
        %v651 = vld [vmem:[#allocation7 + $0x38] sm:$0xf]
        %v652 = vld [vmem:[#allocation7 + $0x3c] sm:$0xf]
        %v653 = vld [vmem:[%s6] sm:$0x1]
        %v655 = vlaneseq
        %v656 = vshrl.u32 %v655, 7
        %v657 = vsub.s32 0, %v656
        %v658 = vrot.slane %v653, %v657
        %v676 = vunpack.c.l.b16 %v637
        %v677 = vunpack.c.l.b16 %v638
        %v678 = vunpack.c.l.b16 %v639
        %v679 = vunpack.c.l.b16 %v640
        %v680 = vunpack.c.l.b16 %v641
        %v681 = vunpack.c.l.b16 %v642
        %v682 = vunpack.c.l.b16 %v643
        %v683 = vunpack.c.l.b16 %v644
        %v684 = vunpack.c.l.b16 %v645
        %v685 = vunpack.c.l.b16 %v646
        %v686 = vunpack.c.l.b16 %v647
        %v687 = vunpack.c.l.b16 %v648
        %v688 = vunpack.c.l.b16 %v649
        %v689 = vunpack.c.l.b16 %v650
        %v690 = vunpack.c.l.b16 %v651
        %v691 = vunpack.c.l.b16 %v652
        %v692 = vpack.c.b16 %v677, %v676
        %v693 = vpack.c.b16 %v679, %v678
        %v694 = vpack.c.b16 %v681, %v680
        %v695 = vpack.c.b16 %v683, %v682
        %v696 = vpack.c.b16 %v685, %v684
        %v697 = vpack.c.b16 %v687, %v686
        %v698 = vpack.c.b16 %v689, %v688
        %v699 = vpack.c.b16 %v691, %v690
        %708 = vmatprep.subr.bf16.mxu0 0
        %709 = vmatpush1.bf16.msra.mxu0 %v692
        %710 = vmatprep.subr.bf16.mxu0 0
        %711 = vmatpush1.bf16.msra.mxu0 %v693
        %712 = vmatprep.subr.bf16.mxu0 0
        %713 = vmatpush1.bf16.msra.mxu0 %v694
        %714 = vmatprep.subr.bf16.mxu0 0
        %715 = vmatpush1.bf16.msra.mxu0 %v695
        %716 = vmatprep.subr.bf16.mxu0 0
        %717 = vmatpush1.bf16.msra.mxu0 %v696
        %718 = vmatprep.subr.bf16.mxu0 0
        %719 = vmatpush1.bf16.msra.mxu0 %v697
        %720 = vmatprep.subr.bf16.mxu0 0
        %721 = vmatpush1.bf16.msra.mxu0 %v698
        %722 = vmatprep.subr.bf16.mxu0 0
        %723 = vmatpush1.bf16.msra.mxu0 %v699
        %724 = vmatprep.subr.bf16.mxu0 0
        %725 = vmatpush1.bf16.msra.mxu0 0
        %726 = vmatprep.subr.bf16.mxu0 0
        %727 = vmatpush1.bf16.msra.mxu0 0
        %728 = vmatprep.subr.bf16.mxu0 0
        %729 = vmatpush1.bf16.msra.mxu0 0
        %730 = vmatprep.subr.bf16.mxu0 0
        %731 = vmatpush1.bf16.msra.mxu0 0
        %732 = vmatprep.subr.bf16.mxu0 0
        %733 = vmatpush1.bf16.msra.mxu0 0
        %734 = vmatprep.subr.bf16.mxu0 0
        %735 = vmatpush1.bf16.msra.mxu0 0
        %736 = vmatprep.subr.bf16.mxu0 0
        %737 = vmatpush1.bf16.msra.mxu0 0
        %738 = vmatprep.subr.bf16.mxu0 0
        %739 = vmatpush1.bf16.msra.mxu0 0
        %740 = vmatprep.mubr.bf16.mxu0 0
        %741 = vmatmul.mubr.bf16.gmra.mrb[0].mxu0 %v522
        %v742 = vpop.f32.mrb[0].mxu0
        %v743 = vadd.f32 %v658, %v742
        %v744 = vpop.f32.mrb[0].mxu0
        %v745 = vpop.f32.mrb[0].mxu0
        %v746 = vpop.f32.mrb[0].mxu0
        %747 = vdwg.mxu0
        %v748 = vpack.c.bf16 %v743, %v743
        %749 = vst [vmem:[%s477] sm:$0xf] %v748
        %v750 = vld [vmem:[#allocation8] sm:$0xf]
        %v751 = vld [vmem:[#allocation8 + $0x4] sm:$0xf]
        %v752 = vld [vmem:[#allocation8 + $0x8] sm:$0xf]
        %v753 = vld [vmem:[#allocation8 + $0xc] sm:$0xf]
        %v754 = vld [vmem:[#allocation8 + $0x10] sm:$0xf]
        %v755 = vld [vmem:[#allocation8 + $0x14] sm:$0xf]
        %v756 = vld [vmem:[#allocation8 + $0x18] sm:$0xf]
        %v757 = vld [vmem:[#allocation8 + $0x1c] sm:$0xf]
        %v758 = vld [vmem:[#allocation8 + $0x20] sm:$0xf]
        %v759 = vld [vmem:[#allocation8 + $0x24] sm:$0xf]
        %v760 = vld [vmem:[#allocation8 + $0x28] sm:$0xf]
        %v761 = vld [vmem:[#allocation8 + $0x2c] sm:$0xf]
        %v762 = vld [vmem:[#allocation8 + $0x30] sm:$0xf]
        %v763 = vld [vmem:[#allocation8 + $0x34] sm:$0xf]
        %v764 = vld [vmem:[#allocation8 + $0x38] sm:$0xf]
        %v765 = vld [vmem:[#allocation8 + $0x3c] sm:$0xf]
        %v766 = vld [vmem:[%s8] sm:$0x1]
        %v768 = vlaneseq
        %v769 = vshrl.u32 %v768, 7
        %v770 = vsub.s32 0, %v769
        %v771 = vrot.slane %v766, %v770
        %v789 = vunpack.c.l.b16 %v750
        %v790 = vunpack.c.l.b16 %v751
        %v791 = vunpack.c.l.b16 %v752
        %v792 = vunpack.c.l.b16 %v753
        %v793 = vunpack.c.l.b16 %v754
        %v794 = vunpack.c.l.b16 %v755
        %v795 = vunpack.c.l.b16 %v756
        %v796 = vunpack.c.l.b16 %v757
        %v797 = vunpack.c.l.b16 %v758
        %v798 = vunpack.c.l.b16 %v759
        %v799 = vunpack.c.l.b16 %v760
        %v800 = vunpack.c.l.b16 %v761
        %v801 = vunpack.c.l.b16 %v762
        %v802 = vunpack.c.l.b16 %v763
        %v803 = vunpack.c.l.b16 %v764
        %v804 = vunpack.c.l.b16 %v765
        %v805 = vpack.c.b16 %v790, %v789
        %v806 = vpack.c.b16 %v792, %v791
        %v807 = vpack.c.b16 %v794, %v793
        %v808 = vpack.c.b16 %v796, %v795
        %v809 = vpack.c.b16 %v798, %v797
        %v810 = vpack.c.b16 %v800, %v799
        %v811 = vpack.c.b16 %v802, %v801
        %v812 = vpack.c.b16 %v804, %v803
        %821 = vmatprep.subr.bf16.mxu0 0
        %822 = vmatpush1.bf16.msra.mxu0 %v805
        %823 = vmatprep.subr.bf16.mxu0 0
        %824 = vmatpush1.bf16.msra.mxu0 %v806
        %825 = vmatprep.subr.bf16.mxu0 0
        %826 = vmatpush1.bf16.msra.mxu0 %v807
        %827 = vmatprep.subr.bf16.mxu0 0
        %828 = vmatpush1.bf16.msra.mxu0 %v808
        %829 = vmatprep.subr.bf16.mxu0 0
        %830 = vmatpush1.bf16.msra.mxu0 %v809
        %831 = vmatprep.subr.bf16.mxu0 0
        %832 = vmatpush1.bf16.msra.mxu0 %v810
        %833 = vmatprep.subr.bf16.mxu0 0
        %834 = vmatpush1.bf16.msra.mxu0 %v811
        %835 = vmatprep.subr.bf16.mxu0 0
        %836 = vmatpush1.bf16.msra.mxu0 %v812
        %837 = vmatprep.subr.bf16.mxu0 0
        %838 = vmatpush1.bf16.msra.mxu0 0
        %839 = vmatprep.subr.bf16.mxu0 0
        %840 = vmatpush1.bf16.msra.mxu0 0
        %841 = vmatprep.subr.bf16.mxu0 0
        %842 = vmatpush1.bf16.msra.mxu0 0
        %843 = vmatprep.subr.bf16.mxu0 0
        %844 = vmatpush1.bf16.msra.mxu0 0
        %845 = vmatprep.subr.bf16.mxu0 0
        %846 = vmatpush1.bf16.msra.mxu0 0
        %847 = vmatprep.subr.bf16.mxu0 0
        %848 = vmatpush1.bf16.msra.mxu0 0
        %849 = vmatprep.subr.bf16.mxu0 0
        %850 = vmatpush1.bf16.msra.mxu0 0
        %851 = vmatprep.subr.bf16.mxu0 0
        %852 = vmatpush1.bf16.msra.mxu0 0
        %853 = vmatprep.mubr.bf16.mxu0 0
        %854 = vmatmul.mubr.bf16.gmra.mrb[0].mxu0 %v522
        %v855 = vpop.f32.mrb[0].mxu0
        %v856 = vadd.f32 %v771, %v855
        %v857 = vpop.f32.mrb[0].mxu0
        %v858 = vpop.f32.mrb[0].mxu0
        %v859 = vpop.f32.mrb[0].mxu0
        %860 = vdwg.mxu0
        %v861 = vpack.c.bf16 %v856, %v856
        %862 = vst [vmem:[%s484] sm:$0xf] %v861
        %s863 = sand.u32 %s252, 1
        %s864 = scalar_lea.sflag [#allocation4], %s863
        %s865 = sand.u32 %s252, 1
        %s866 = smul.addr %s865, 4
        %s867 = scalar_lea.vmem [#allocation10], %s866
        %s868 = sand.u32 %s34, 1
        %s869 = scalar_lea.sflag [#allocation12], %s868
        %s870 = sand.u32 %s280, 1
        %s871 = smul.addr %s870, 4
        %s872 = scalar_lea.vmem [#allocation11], %s871
        %s873 = sand.u32 %s34, 1
        %s874 = scalar_lea.sflag [#allocation12], %s873
        %s875 = sand.u32 %s308, 1
        %s876 = smul.addr %s875, 4
        %s877 = scalar_lea.vmem [#allocation13], %s876
        // Predicated region
        $region73: #{tpu_custom_call.1} parent=55 // pred_check
          %p878 = pneg %p262
        $region74: #{tpu_custom_call.1} parent=55 // pred_check_branch
          %880 = sbr.rel (%p878) target = $region76
        $region75: #{tpu_custom_call.1} parent=55 // pred_region
          %s882 = ssub.s32 64, 64
          %883 = vsyncadd %s864, %s882
          %s884 = sadd.s32 %s39, %s38
          %s885 = smul.addr %s884, 64
          %s886 = scalar_lea.hbm %s9, %s885
          %s888 = sshll.u32 %s867, 4
          %s889 = int_to_ptr.vmem [resolvable:$true] %s888
          %891 = dma.vmem_to_hbm [thread:$0]  %s889, 64, %s886, %s864
        $region76: #{tpu_custom_call.1} parent=55 // pred_fallthru
          _
        // Predicated region
        $region77: #{tpu_custom_call.1} parent=55 // pred_check
          %p892 = pneg %p290
        $region78: #{tpu_custom_call.1} parent=55 // pred_check_branch
          %894 = sbr.rel (%p892) target = $region80
        $region79: #{tpu_custom_call.1} parent=55 // pred_region
          %s896 = ssub.s32 64, 64
          %897 = vsyncadd %s869, %s896
          %s898 = sadd.s32 %s39, %s38
          %s899 = smul.addr %s898, 64
          %s900 = scalar_lea.hbm %s10, %s899
          %s902 = sshll.u32 %s872, 4
          %s903 = int_to_ptr.vmem [resolvable:$true] %s902
          %905 = dma.vmem_to_hbm [thread:$0]  %s903, 64, %s900, %s869
        $region80: #{tpu_custom_call.1} parent=55 // pred_fallthru
          _
        // Predicated region
        $region81: #{tpu_custom_call.1} parent=55 // pred_check
          %p906 = pneg %p318
        $region82: #{tpu_custom_call.1} parent=55 // pred_check_branch
          %908 = sbr.rel (%p906) target = $region84
        $region83: #{tpu_custom_call.1} parent=55 // pred_region
          %s910 = ssub.s32 64, 64
          %911 = vsyncadd %s874, %s910
          %s912 = sadd.s32 %s39, %s38
          %s913 = smul.addr %s912, 64
          %s914 = scalar_lea.hbm %s11, %s913
          %s916 = sshll.u32 %s877, 4
          %s917 = int_to_ptr.vmem [resolvable:$true] %s916
          %919 = dma.vmem_to_hbm [thread:$0]  %s917, 64, %s914, %s874
        $region84: #{tpu_custom_call.1} parent=55 // pred_fallthru
          _
      $region56: #{tpu_custom_call.1} parent=5 // pred_fallthru
        _
      %p920 = scmp.le.s32.totalorder 2, %s29
      // Predicated region
      $region85: #{tpu_custom_call.1} parent=5 // pred_check
        %p921 = pneg %p920
      $region86: #{tpu_custom_call.1} parent=5 // pred_check_branch
        %923 = sbr.rel (%p921) target = $region88
      $region87: #{tpu_custom_call.1} parent=5 // pred_region
        %s924 = ssub.s32 %s29, 2
        // Predicated region
        $region89: #{tpu_custom_call.1} parent=87 // pred_check
          %p925 = pneg %p268
        $region90: #{tpu_custom_call.1} parent=87 // pred_check_branch
          %927 = sbr.rel (%p925) target = $region92
        $region91: #{tpu_custom_call.1} parent=87 // pred_region
          %s928 = sand.u32 %s253, 1
          %s929 = scalar_lea.sflag [#allocation4], %s928
          %s930 = sand.u32 %s253, 1
          %s931 = smul.addr %s930, 4
          %s932 = scalar_lea.vmem [#allocation10], %s931
          %933 = dma.done %s929, 64
        $region92: #{tpu_custom_call.1} parent=87 // pred_fallthru
          _
        // Predicated region
        $region93: #{tpu_custom_call.1} parent=87 // pred_check
          %p934 = pneg %p296
        $region94: #{tpu_custom_call.1} parent=87 // pred_check_branch
          %936 = sbr.rel (%p934) target = $region96
        $region95: #{tpu_custom_call.1} parent=87 // pred_region
          %s937 = sand.u32 %s35, 1
          %s938 = scalar_lea.sflag [#allocation12], %s937
          %s939 = sand.u32 %s281, 1
          %s940 = smul.addr %s939, 4
          %s941 = scalar_lea.vmem [#allocation11], %s940
          %942 = dma.done %s938, 64
        $region96: #{tpu_custom_call.1} parent=87 // pred_fallthru
          _
        // Predicated region
        $region97: #{tpu_custom_call.1} parent=87 // pred_check
          %p943 = pneg %p324
        $region98: #{tpu_custom_call.1} parent=87 // pred_check_branch
          %945 = sbr.rel (%p943) target = $region100
        $region99: #{tpu_custom_call.1} parent=87 // pred_region
          %s946 = sand.u32 %s35, 1
          %s947 = scalar_lea.sflag [#allocation12], %s946
          %s948 = sand.u32 %s309, 1
          %s949 = smul.addr %s948, 4
          %s950 = scalar_lea.vmem [#allocation13], %s949
          %951 = dma.done %s947, 64
        $region100: #{tpu_custom_call.1} parent=87 // pred_fallthru
          _
      $region88: #{tpu_custom_call.1} parent=5 // pred_fallthru
        _
    $region6: #{tpu_custom_call.1} parent=1 // loop_footer
      %s33 = sadd.s32 1, %s29
    $region7: #{tpu_custom_call.1} parent=1 // loop_footer_branch
      %28 = sbr.rel target = $region3
    $region8: #{tpu_custom_call.1} parent=1 // loop_exit
      _
    %952 = vsyncpa [#allocation3], 1
    %s953 = scalar_lea.sflag [#allocation3], 1
    %954 = vsyncpa %s953, 1
    %955 = vsyncpa [#allocation6], 1
    %956 = vsyncpa [#allocation9], 1
    %957 = vsyncpa [#allocation4], 1
    %s958 = scalar_lea.sflag [#allocation4], 1
    %959 = vsyncpa %s958, 1
    %960 = vsyncpa [#allocation12], 1
    %s961 = scalar_lea.sflag [#allocation12], 1
    %962 = vsyncpa %s961, 1

// kernel: tpu_custom_call.1
$region0: #{tpu_custom_call.1}
  #allocation0 [shape = 'u32[]', space=smem, size = 0x4, offset = 0x4, fixed_abs, tag = 'smem constant byte address 0x4 - core index']
  #allocation1 [shape = 'u32[144,128]{1,0:T(1,128)}', space=vmem, size = 0x12000, scoped, tag = 'internal scratch']
  %s0 = inlined_call_operand.hbm [shape: f32[2,8,128], index: 0, kind: input, shape index: {}]
  %s1 = inlined_call_operand.vmem [shape: f32[1,128], index: 1, kind: input, shape index: {}]
  %s2 = inlined_call_operand.vmem [shape: f32[1,128], index: 2, kind: input, shape index: {}]
  %s3 = inlined_call_operand.hbm [shape: bf16[128,128], index: 3, kind: input, shape index: {}]
  %s4 = inlined_call_operand.vmem [shape: f32[1,128], index: 4, kind: input, shape index: {}]
  %s5 = inlined_call_operand.hbm [shape: bf16[128,128], index: 5, kind: input, shape index: {}]
  %s6 = inlined_call_operand.vmem [shape: f32[1,128], index: 6, kind: input, shape index: {}]
  %s7 = inlined_call_operand.hbm [shape: bf16[128,128], index: 7, kind: input, shape index: {}]
  %s8 = inlined_call_operand.vmem [shape: f32[1,128], index: 8, kind: input, shape index: {}]
  %s9 = inlined_call_operand.hbm [shape: bf16[2,8,128], index: 9, kind: output, shape index: {0}]
  %s10 = inlined_call_operand.hbm [shape: bf16[2,8,128], index: 10, kind: output, shape index: {1}]
  %s11 = inlined_call_operand.hbm [shape: bf16[2,8,128], index: 11, kind: output, shape index: {2}]
  %12 = xla_tuple %s9, %s10, %s11
  %s13 = sld [smem:[#allocation0]]
  $region101: #{tpu_custom_call.1} parent=0
    _
  %s15 = ssub.s32 1, %s13
  %s16 = scalar_select 0, %s15, %s13
  $region1: #{tpu_custom_call.1} parent=0
    #allocation2 [shape = 'u8[8192]{0}', space=vmem, size = 0x2000, scoped, tag = 'input window, operand 0']
    #allocation3 [shape = 's32[2]{0}', space=sflag, size = 0x8, scoped, tag = 'scoped memory for tpu_custom_call.1']
    #allocation4 [shape = 's32[2]{0}', space=sflag, size = 0x8, scoped, tag = 'scoped memory for tpu_custom_call.1']
    #allocation5 [shape = 'u8[32768]{0}', space=vmem, size = 0x8000, scoped, tag = 'input window, operand 3, single buffered']
    #allocation6 [shape = 's32[1]{0}', space=sflag, size = 0x4, scoped, tag = 'scoped memory for tpu_custom_call.1']
    #allocation7 [shape = 'u8[32768]{0}', space=vmem, size = 0x8000, scoped, tag = 'input window, operand 5, single buffered']
    #allocation8 [shape = 'u8[32768]{0}', space=vmem, size = 0x8000, scoped, tag = 'input window, operand 7, single buffered']
    #allocation9 [shape = 's32[1]{0}', space=sflag, size = 0x4, scoped, tag = 'scoped memory for tpu_custom_call.1']
    #allocation10 [shape = 'u8[4096]{0}', space=vmem, size = 0x1000, scoped, tag = 'output window, operand 0']
    #allocation11 [shape = 'u8[4096]{0}', space=vmem, size = 0x1000, scoped, tag = 'output window, operand 1']
    #allocation12 [shape = 's32[2]{0}', space=sflag, size = 0x8, scoped, tag = 'scoped memory for tpu_custom_call.1']
    #allocation13 [shape = 'u8[4096]{0}', space=vmem, size = 0x1000, scoped, tag = 'output window, operand 2']
    %17 = vsyncpa [#allocation3], 0
    %s18 = scalar_lea.sflag [#allocation3], 1
    %19 = vsyncpa %s18, 0
    %20 = vsyncpa [#allocation6], 0
    %21 = vsyncpa [#allocation9], 0
    %22 = vsyncpa [#allocation4], 0
    %s23 = scalar_lea.sflag [#allocation4], 1
    %24 = vsyncpa %s23, 0
    %25 = vsyncpa [#allocation12], 0
    %s26 = scalar_lea.sflag [#allocation12], 1
    %27 = vsyncpa %s26, 0
    loop: start=0, step=1, limit=4
    $region2: #{tpu_custom_call.1} parent=1 // loop_pre_header
      _
    $region3: #{tpu_custom_call.1} parent=1 // loop_header
      %s29 = sphi 0, %s33
      %p30 = scmp.ge.s32.totalorder %s29, 4
      %s36 = sphi 0, %s48
      %s37 = sphi 0, %s44
      %s38 = sphi 0, %s36
      %s39 = sphi 0, %s37
      %s40 = sphi 0, %s38
      %s41 = sphi 0, %s39
      %s53 = sphi 0, %s55
      %s56 = sphi 0, %s53
      %s57 = sphi 0, %s56
      %s73 = sphi 0, %s57
      %s77 = sphi 0, %s77
      %s79 = sphi 0, %s77
      %s80 = sphi 0, %s79
      %s94 = sphi 0, %s80
      %s98 = sphi 0, %s98
      %s100 = sphi 0, %s98
      %s101 = sphi 0, %s100
      %s115 = sphi 0, %s101
      %s119 = sphi 0, %s119
      %s121 = sphi 0, %s119
      %s122 = sphi 0, %s121
      %s136 = sphi 0, %s122
      %s140 = sphi 0, %s140
      %s142 = sphi 0, %s140
      %s143 = sphi 0, %s142
      %s157 = sphi 0, %s143
      %s161 = sphi 0, %s161
      %s163 = sphi 0, %s161
      %s164 = sphi 0, %s163
      %s178 = sphi 0, %s164
      %s182 = sphi 0, %s182
      %s184 = sphi 0, %s182
      %s185 = sphi 0, %s184
      %s199 = sphi 0, %s185
      %s203 = sphi 0, %s203
      %s205 = sphi 0, %s203
      %s206 = sphi 0, %s205
      %s220 = sphi 0, %s206
      %s224 = sphi 0, %s224
      %s226 = sphi 0, %s224
      %s227 = sphi 0, %s226
      %s241 = sphi 0, %s227
      %s249 = sphi 0, %s251
      %s252 = sphi 0, %s249
      %s253 = sphi 0, %s252
      %s269 = sphi 0, %s253
      %s277 = sphi 0, %s279
      %s280 = sphi 0, %s277
      %s281 = sphi 0, %s280
      %s297 = sphi 0, %s281
      %s305 = sphi 0, %s307
      %s308 = sphi 0, %s305
      %s309 = sphi 0, %s308
      %s325 = sphi 0, %s309
    $region4: #{tpu_custom_call.1} parent=1 // loop_header_branch
      %32 = sbr.rel (%p30) target = $region8
    $region5: #{tpu_custom_call.1} parent=1 // loop_body
      %s34 = ssub.s32 %s29, 1
      %s35 = ssub.s32 %s29, 2
      %s42 = sadd.s32 1, %s37
      %p43 = scmp.ge.s32.totalorder %s42, 1
      %s44 = scalar_select %p43, 0, %s42
      %s45 = sadd.s32 1, %s36
      %s46 = scalar_select %p43, %s45, %s36
      %p47 = scmp.ge.s32.totalorder %s46, 2
      %s48 = scalar_select %p47, 0, %s46
      %s49 = ssub.s32 %s36, %s48
      %s50 = ssub.s32 %s37, %s44
      %s51 = sor.u32 %s49, %s50
      %p52 = scmp.eq.s32.totalorder %s51, 0
      %s54 = sadd.s32 %s53, 1
      %s55 = scalar_select %p52, %s53, %s54
      %p58 = pneg %p52
      %p59 = scmp.eq.s32.totalorder %s29, 1
      %p60 = por %p58, %p59
      %p61 = scmp.ne.s32.totalorder %s53, %s56
      %p62 = scmp.eq.s32.totalorder %s29, 0
      %p63 = por %p61, %p62
      %p64 = scmp.ne.s32.totalorder %s53, %s56
      %p65 = scmp.eq.s32.totalorder %s34, 1
      %p66 = por %p64, %p65
      %p67 = scmp.ne.s32.totalorder %s56, %s57
      %p68 = scmp.eq.s32.totalorder %s34, 0
      %p69 = por %p67, %p68
      %p70 = scmp.ne.s32.totalorder %s56, %s57
      %p71 = scmp.eq.s32.totalorder %s35, 1
      %p72 = por %p70, %p71
      %p74 = scmp.ne.s32.totalorder %s57, %s73
      %p75 = scmp.eq.s32.totalorder %s35, 0
      %p76 = por %p74, %p75
      %s78 = sadd.s32 %s77, 1
      %p81 = scmp.eq.s32.totalorder %s29, 1
      %p82 = scmp.ne.s32.totalorder %s77, %s79
      %p83 = scmp.eq.s32.totalorder %s29, 0
      %p84 = por %p82, %p83
      %p85 = scmp.ne.s32.totalorder %s77, %s79
      %p86 = scmp.eq.s32.totalorder %s34, 1
      %p87 = por %p85, %p86
      %p88 = scmp.ne.s32.totalorder %s79, %s80
      %p89 = scmp.eq.s32.totalorder %s34, 0
      %p90 = por %p88, %p89
      %p91 = scmp.ne.s32.totalorder %s79, %s80
      %p92 = scmp.eq.s32.totalorder %s35, 1
      %p93 = por %p91, %p92
      %p95 = scmp.ne.s32.totalorder %s80, %s94
      %p96 = scmp.eq.s32.totalorder %s35, 0
      %p97 = por %p95, %p96
      %s99 = sadd.s32 %s98, 1
      %p102 = scmp.eq.s32.totalorder %s29, 1
      %p103 = scmp.ne.s32.totalorder %s98, %s100
      %p104 = scmp.eq.s32.totalorder %s29, 0
      %p105 = por %p103, %p104
      %p106 = scmp.ne.s32.totalorder %s98, %s100
      %p107 = scmp.eq.s32.totalorder %s34, 1
      %p108 = por %p106, %p107
      %p109 = scmp.ne.s32.totalorder %s100, %s101
      %p110 = scmp.eq.s32.totalorder %s34, 0
      %p111 = por %p109, %p110
      %p112 = scmp.ne.s32.totalorder %s100, %s101
      %p113 = scmp.eq.s32.totalorder %s35, 1
      %p114 = por %p112, %p113
      %p116 = scmp.ne.s32.totalorder %s101, %s115
      %p117 = scmp.eq.s32.totalorder %s35, 0
      %p118 = por %p116, %p117
      %s120 = sadd.s32 %s119, 1
      %p123 = scmp.eq.s32.totalorder %s29, 1
      %p124 = scmp.ne.s32.totalorder %s119, %s121
      %p125 = scmp.eq.s32.totalorder %s29, 0
      %p126 = por %p124, %p125
      %p127 = scmp.ne.s32.totalorder %s119, %s121
      %p128 = scmp.eq.s32.totalorder %s34, 1
      %p129 = por %p127, %p128
      %p130 = scmp.ne.s32.totalorder %s121, %s122
      %p131 = scmp.eq.s32.totalorder %s34, 0
      %p132 = por %p130, %p131
      %p133 = scmp.ne.s32.totalorder %s121, %s122
      %p134 = scmp.eq.s32.totalorder %s35, 1
      %p135 = por %p133, %p134
      %p137 = scmp.ne.s32.totalorder %s122, %s136
      %p138 = scmp.eq.s32.totalorder %s35, 0
      %p139 = por %p137, %p138
      %s141 = sadd.s32 %s140, 1
      %p144 = scmp.eq.s32.totalorder %s29, 1
      %p145 = scmp.ne.s32.totalorder %s140, %s142
      %p146 = scmp.eq.s32.totalorder %s29, 0
      %p147 = por %p145, %p146
      %p148 = scmp.ne.s32.totalorder %s140, %s142
      %p149 = scmp.eq.s32.totalorder %s34, 1
      %p150 = por %p148, %p149
      %p151 = scmp.ne.s32.totalorder %s142, %s143
      %p152 = scmp.eq.s32.totalorder %s34, 0
      %p153 = por %p151, %p152
      %p154 = scmp.ne.s32.totalorder %s142, %s143
      %p155 = scmp.eq.s32.totalorder %s35, 1
      %p156 = por %p154, %p155
      %p158 = scmp.ne.s32.totalorder %s143, %s157
      %p159 = scmp.eq.s32.totalorder %s35, 0
      %p160 = por %p158, %p159
      %s162 = sadd.s32 %s161, 1
      %p165 = scmp.eq.s32.totalorder %s29, 1
      %p166 = scmp.ne.s32.totalorder %s161, %s163
      %p167 = scmp.eq.s32.totalorder %s29, 0
      %p168 = por %p166, %p167
      %p169 = scmp.ne.s32.totalorder %s161, %s163
      %p170 = scmp.eq.s32.totalorder %s34, 1
      %p171 = por %p169, %p170
      %p172 = scmp.ne.s32.totalorder %s163, %s164
      %p173 = scmp.eq.s32.totalorder %s34, 0
      %p174 = por %p172, %p173
      %p175 = scmp.ne.s32.totalorder %s163, %s164
      %p176 = scmp.eq.s32.totalorder %s35, 1
      %p177 = por %p175, %p176
      %p179 = scmp.ne.s32.totalorder %s164, %s178
      %p180 = scmp.eq.s32.totalorder %s35, 0
      %p181 = por %p179, %p180
      %s183 = sadd.s32 %s182, 1
      %p186 = scmp.eq.s32.totalorder %s29, 1
      %p187 = scmp.ne.s32.totalorder %s182, %s184
      %p188 = scmp.eq.s32.totalorder %s29, 0
      %p189 = por %p187, %p188
      %p190 = scmp.ne.s32.totalorder %s182, %s184
      %p191 = scmp.eq.s32.totalorder %s34, 1
      %p192 = por %p190, %p191
      %p193 = scmp.ne.s32.totalorder %s184, %s185
      %p194 = scmp.eq.s32.totalorder %s34, 0
      %p195 = por %p193, %p194
      %p196 = scmp.ne.s32.totalorder %s184, %s185
      %p197 = scmp.eq.s32.totalorder %s35, 1
      %p198 = por %p196, %p197
      %p200 = scmp.ne.s32.totalorder %s185, %s199
      %p201 = scmp.eq.s32.totalorder %s35, 0
      %p202 = por %p200, %p201
      %s204 = sadd.s32 %s203, 1
      %p207 = scmp.eq.s32.totalorder %s29, 1
      %p208 = scmp.ne.s32.totalorder %s203, %s205
      %p209 = scmp.eq.s32.totalorder %s29, 0
      %p210 = por %p208, %p209
      %p211 = scmp.ne.s32.totalorder %s203, %s205
      %p212 = scmp.eq.s32.totalorder %s34, 1
      %p213 = por %p211, %p212
      %p214 = scmp.ne.s32.totalorder %s205, %s206
      %p215 = scmp.eq.s32.totalorder %s34, 0
      %p216 = por %p214, %p215
      %p217 = scmp.ne.s32.totalorder %s205, %s206
      %p218 = scmp.eq.s32.totalorder %s35, 1
      %p219 = por %p217, %p218
      %p221 = scmp.ne.s32.totalorder %s206, %s220
      %p222 = scmp.eq.s32.totalorder %s35, 0
      %p223 = por %p221, %p222
      %s225 = sadd.s32 %s224, 1
      %p228 = scmp.eq.s32.totalorder %s29, 1
      %p229 = scmp.ne.s32.totalorder %s224, %s226
      %p230 = scmp.eq.s32.totalorder %s29, 0
      %p231 = por %p229, %p230
      %p232 = scmp.ne.s32.totalorder %s224, %s226
      %p233 = scmp.eq.s32.totalorder %s34, 1
      %p234 = por %p232, %p233
      %p235 = scmp.ne.s32.totalorder %s226, %s227
      %p236 = scmp.eq.s32.totalorder %s34, 0
      %p237 = por %p235, %p236
      %p238 = scmp.ne.s32.totalorder %s226, %s227
      %p239 = scmp.eq.s32.totalorder %s35, 1
      %p240 = por %p238, %p239
      %p242 = scmp.ne.s32.totalorder %s227, %s241
      %p243 = scmp.eq.s32.totalorder %s35, 0
      %p244 = por %p242, %p243
      %s245 = ssub.s32 %s36, %s48
      %s246 = ssub.s32 %s37, %s44
      %s247 = sor.u32 %s245, %s246
      %p248 = scmp.eq.s32.totalorder %s247, 0
      %s250 = sadd.s32 %s249, 1
      %s251 = scalar_select %p248, %s249, %s250
      %p254 = pneg %p248
      %p255 = scmp.eq.s32.totalorder %s29, 1
      %p256 = por %p254, %p255
      %p257 = scmp.ne.s32.totalorder %s249, %s252
      %p258 = scmp.eq.s32.totalorder %s29, 0
      %p259 = por %p257, %p258
      %p260 = scmp.ne.s32.totalorder %s249, %s252
      %p261 = scmp.eq.s32.totalorder %s34, 1
      %p262 = por %p260, %p261
      %p263 = scmp.ne.s32.totalorder %s252, %s253
      %p264 = scmp.eq.s32.totalorder %s34, 0
      %p265 = por %p263, %p264
      %p266 = scmp.ne.s32.totalorder %s252, %s253
      %p267 = scmp.eq.s32.totalorder %s35, 1
      %p268 = por %p266, %p267
      %p270 = scmp.ne.s32.totalorder %s253, %s269
      %p271 = scmp.eq.s32.totalorder %s35, 0
      %p272 = por %p270, %p271
      %s273 = ssub.s32 %s36, %s48
      %s274 = ssub.s32 %s37, %s44
      %s275 = sor.u32 %s273, %s274
      %p276 = scmp.eq.s32.totalorder %s275, 0
      %s278 = sadd.s32 %s277, 1
      %s279 = scalar_select %p276, %s277, %s278
      %p282 = pneg %p276
      %p283 = scmp.eq.s32.totalorder %s29, 1
      %p284 = por %p282, %p283
      %p285 = scmp.ne.s32.totalorder %s277, %s280
      %p286 = scmp.eq.s32.totalorder %s29, 0
      %p287 = por %p285, %p286
      %p288 = scmp.ne.s32.totalorder %s277, %s280
      %p289 = scmp.eq.s32.totalorder %s34, 1
      %p290 = por %p288, %p289
      %p291 = scmp.ne.s32.totalorder %s280, %s281
      %p292 = scmp.eq.s32.totalorder %s34, 0
      %p293 = por %p291, %p292
      %p294 = scmp.ne.s32.totalorder %s280, %s281
      %p295 = scmp.eq.s32.totalorder %s35, 1
      %p296 = por %p294, %p295
      %p298 = scmp.ne.s32.totalorder %s281, %s297
      %p299 = scmp.eq.s32.totalorder %s35, 0
      %p300 = por %p298, %p299
      %s301 = ssub.s32 %s36, %s48
      %s302 = ssub.s32 %s37, %s44
      %s303 = sor.u32 %s301, %s302
      %p304 = scmp.eq.s32.totalorder %s303, 0
      %s306 = sadd.s32 %s305, 1
      %s307 = scalar_select %p304, %s305, %s306
      %p310 = pneg %p304
      %p311 = scmp.eq.s32.totalorder %s29, 1
      %p312 = por %p310, %p311
      %p313 = scmp.ne.s32.totalorder %s305, %s308
      %p314 = scmp.eq.s32.totalorder %s29, 0
      %p315 = por %p313, %p314
      %p316 = scmp.ne.s32.totalorder %s305, %s308
      %p317 = scmp.eq.s32.totalorder %s34, 1
      %p318 = por %p316, %p317
      %p319 = scmp.ne.s32.totalorder %s308, %s309
      %p320 = scmp.eq.s32.totalorder %s34, 0
      %p321 = por %p319, %p320
      %p322 = scmp.ne.s32.totalorder %s308, %s309
      %p323 = scmp.eq.s32.totalorder %s35, 1
      %p324 = por %p322, %p323
      %p326 = scmp.ne.s32.totalorder %s309, %s325
      %p327 = scmp.eq.s32.totalorder %s35, 0
      %p328 = por %p326, %p327
      %p329 = scmp.le.s32.totalorder 1, %s29
      %p330 = scmp.lt.s32.totalorder %s29, 3
      %p331 = pnand %p329, %p330
      %p332 = pneg %p331
      // Predicated region
      $region9: #{tpu_custom_call.1} parent=5 // pred_check
        _
      $region10: #{tpu_custom_call.1} parent=5 // pred_check_branch
        %334 = sbr.rel (%p331) target = $region12
      $region11: #{tpu_custom_call.1} parent=5 // pred_region
        %s335 = ssub.s32 %s29, 1
        // Predicated region
        $region13: #{tpu_custom_call.1} parent=11 // pred_check
          %p336 = pneg %p90
        $region14: #{tpu_custom_call.1} parent=11 // pred_check_branch
          %338 = sbr.rel (%p336) target = $region16
        $region15: #{tpu_custom_call.1} parent=11 // pred_region
          _
        $region16: #{tpu_custom_call.1} parent=11 // pred_fallthru
          _
        // Predicated region
        $region17: #{tpu_custom_call.1} parent=11 // pred_check
          %p339 = pneg %p111
        $region18: #{tpu_custom_call.1} parent=11 // pred_check_branch
          %341 = sbr.rel (%p339) target = $region20
        $region19: #{tpu_custom_call.1} parent=11 // pred_region
          _
        $region20: #{tpu_custom_call.1} parent=11 // pred_fallthru
          _
        // Predicated region
        $region21: #{tpu_custom_call.1} parent=11 // pred_check
          %p342 = pneg %p132
        $region22: #{tpu_custom_call.1} parent=11 // pred_check_branch
          %344 = sbr.rel (%p342) target = $region24
        $region23: #{tpu_custom_call.1} parent=11 // pred_region
          %s346 = ssub.s32 1024, 1024
          %347 = vsyncadd [#allocation6], %s346
          %s348 = sshll.u32 [#allocation5], 4
          %s349 = int_to_ptr.vmem [resolvable:$true] %s348
          %354 = dma.hbm_to_vmem [thread:$0]  %s3, 1024, %s349, [#allocation6], 64, 64, 4
        $region24: #{tpu_custom_call.1} parent=11 // pred_fallthru
          _
        // Predicated region
        $region25: #{tpu_custom_call.1} parent=11 // pred_check
          %p355 = pneg %p153
        $region26: #{tpu_custom_call.1} parent=11 // pred_check_branch
          %357 = sbr.rel (%p355) target = $region28
        $region27: #{tpu_custom_call.1} parent=11 // pred_region
          _
        $region28: #{tpu_custom_call.1} parent=11 // pred_fallthru
          _
        // Predicated region
        $region29: #{tpu_custom_call.1} parent=11 // pred_check
          %p358 = pneg %p174
        $region30: #{tpu_custom_call.1} parent=11 // pred_check_branch
          %360 = sbr.rel (%p358) target = $region32
        $region31: #{tpu_custom_call.1} parent=11 // pred_region
          %s362 = ssub.s32 1024, 1024
          %363 = vsyncadd [#allocation6], %s362
          %s364 = sshll.u32 [#allocation7], 4
          %s365 = int_to_ptr.vmem [resolvable:$true] %s364
          %370 = dma.hbm_to_vmem [thread:$0]  %s5, 1024, %s365, [#allocation6], 64, 64, 4
        $region32: #{tpu_custom_call.1} parent=11 // pred_fallthru
          _
        // Predicated region
        $region33: #{tpu_custom_call.1} parent=11 // pred_check
          %p371 = pneg %p195
        $region34: #{tpu_custom_call.1} parent=11 // pred_check_branch
          %373 = sbr.rel (%p371) target = $region36
        $region35: #{tpu_custom_call.1} parent=11 // pred_region
          _
        $region36: #{tpu_custom_call.1} parent=11 // pred_fallthru
          _
        // Predicated region
        $region37: #{tpu_custom_call.1} parent=11 // pred_check
          %p374 = pneg %p216
        $region38: #{tpu_custom_call.1} parent=11 // pred_check_branch
          %376 = sbr.rel (%p374) target = $region40
        $region39: #{tpu_custom_call.1} parent=11 // pred_region
          %s378 = ssub.s32 1024, 1024
          %379 = vsyncadd [#allocation9], %s378
          %s380 = sshll.u32 [#allocation8], 4
          %s381 = int_to_ptr.vmem [resolvable:$true] %s380
          %386 = dma.hbm_to_vmem [thread:$0]  %s7, 1024, %s381, [#allocation9], 64, 64, 4
        $region40: #{tpu_custom_call.1} parent=11 // pred_fallthru
          _
        // Predicated region
        $region41: #{tpu_custom_call.1} parent=11 // pred_check
          %p387 = pneg %p237
        $region42: #{tpu_custom_call.1} parent=11 // pred_check_branch
          %389 = sbr.rel (%p387) target = $region44
        $region43: #{tpu_custom_call.1} parent=11 // pred_region
          _
        $region44: #{tpu_custom_call.1} parent=11 // pred_fallthru
          _
      $region12: #{tpu_custom_call.1} parent=5 // pred_fallthru
        _
      %p390 = scmp.lt.s32.totalorder %s29, 2
      // Predicated region
      $region45: #{tpu_custom_call.1} parent=5 // pred_check
        %p391 = pneg %p390
      $region46: #{tpu_custom_call.1} parent=5 // pred_check_branch
        %393 = sbr.rel (%p391) target = $region48
      $region47: #{tpu_custom_call.1} parent=5 // pred_region
        // Predicated region
        $region49: #{tpu_custom_call.1} parent=47 // pred_check
          %p394 = pneg %p63
        $region50: #{tpu_custom_call.1} parent=47 // pred_check_branch
          %396 = sbr.rel (%p394) target = $region52
        $region51: #{tpu_custom_call.1} parent=47 // pred_region
          %s397 = sand.u32 %s53, 1
          %s398 = scalar_lea.sflag [#allocation3], %s397
          %s399 = sand.u32 %s53, 1
          %s400 = smul.addr %s399, 8
          %s401 = scalar_lea.vmem [#allocation2], %s400
          %s403 = ssub.s32 128, 128
          %404 = vsyncadd %s398, %s403
          %s405 = sadd.s32 %s37, %s36
          %s406 = smul.addr %s405, 128
          %s407 = scalar_lea.hbm %s0, %s406
          %s409 = sshll.u32 %s401, 4
          %s410 = int_to_ptr.vmem [resolvable:$true] %s409
          %412 = dma.hbm_to_vmem [thread:$0]  %s407, 128, %s410, %s398
        $region52: #{tpu_custom_call.1} parent=47 // pred_fallthru
          _
      $region48: #{tpu_custom_call.1} parent=5 // pred_fallthru
        _
      %p413 = scmp.le.s32.totalorder 1, %s29
      %p414 = scmp.lt.s32.totalorder %s29, 3
      %p415 = pnand %p413, %p414
      %p416 = pneg %p415
      // Predicated region
      $region53: #{tpu_custom_call.1} parent=5 // pred_check
        _
      $region54: #{tpu_custom_call.1} parent=5 // pred_check_branch
        %418 = sbr.rel (%p415) target = $region56
      $region55: #{tpu_custom_call.1} parent=5 // pred_region
        %s419 = ssub.s32 %s29, 1
        %s420 = sand.u32 %s56, 1
        %s421 = scalar_lea.sflag [#allocation3], %s420
        %s422 = sand.u32 %s56, 1
        %s423 = smul.addr %s422, 8
        %s424 = scalar_lea.vmem [#allocation2], %s423
        // Predicated region
        $region57: #{tpu_custom_call.1} parent=55 // pred_check
          %p425 = pneg %p69
        $region58: #{tpu_custom_call.1} parent=55 // pred_check_branch
          %427 = sbr.rel (%p425) target = $region60
        $region59: #{tpu_custom_call.1} parent=55 // pred_region
          %428 = dma.done %s421, 128
        $region60: #{tpu_custom_call.1} parent=55 // pred_fallthru
          _
        // Predicated region
        $region61: #{tpu_custom_call.1} parent=55 // pred_check
          %p429 = pneg %p132
        $region62: #{tpu_custom_call.1} parent=55 // pred_check_branch
          %431 = sbr.rel (%p429) target = $region64
        $region63: #{tpu_custom_call.1} parent=55 // pred_region
          %432 = dma.done [#allocation6], 1024
        $region64: #{tpu_custom_call.1} parent=55 // pred_fallthru
          _
        // Predicated region
        $region65: #{tpu_custom_call.1} parent=55 // pred_check
          %p433 = pneg %p174
        $region66: #{tpu_custom_call.1} parent=55 // pred_check_branch
          %435 = sbr.rel (%p433) target = $region68
        $region67: #{tpu_custom_call.1} parent=55 // pred_region
          %436 = dma.done [#allocation6], 1024
        $region68: #{tpu_custom_call.1} parent=55 // pred_fallthru
          _
        // Predicated region
        $region69: #{tpu_custom_call.1} parent=55 // pred_check
          %p437 = pneg %p216
        $region70: #{tpu_custom_call.1} parent=55 // pred_check_branch
          %439 = sbr.rel (%p437) target = $region72
        $region71: #{tpu_custom_call.1} parent=55 // pred_region
          %440 = dma.done [#allocation9], 1024
        $region72: #{tpu_custom_call.1} parent=55 // pred_fallthru
          _
        %s441 = sand.u32 %s56, 1
        %s442 = scalar_lea.sflag [#allocation3], %s441
        %s443 = sand.u32 %s56, 1
        %s444 = smul.addr %s443, 8
        %s445 = scalar_lea.vmem [#allocation2], %s444
        %p446 = pneg %p69
        %p447 = pneg %p66
        %p448 = pneg %p90
        %p449 = pneg %p87
        %p450 = pneg %p111
        %p451 = pneg %p108
        %p452 = pneg %p132
        %p453 = pneg %p129
        %p454 = pneg %p153
        %p455 = pneg %p150
        %p456 = pneg %p174
        %p457 = pneg %p171
        %p458 = pneg %p195
        %p459 = pneg %p192
        %p460 = pneg %p216
        %p461 = pneg %p213
        %p462 = pneg %p237
        %p463 = pneg %p234
        %p464 = pneg %p265
        %p465 = pneg %p262
        %s466 = sand.u32 %s252, 1
        %s467 = scalar_lea.sflag [#allocation4], %s466
        %s468 = sand.u32 %s252, 1
        %s469 = smul.addr %s468, 4
        %s470 = scalar_lea.vmem [#allocation10], %s469
        %p471 = pneg %p293
        %p472 = pneg %p290
        %s473 = sand.u32 %s34, 1
        %s474 = scalar_lea.sflag [#allocation12], %s473
        %s475 = sand.u32 %s280, 1
        %s476 = smul.addr %s475, 4
        %s477 = scalar_lea.vmem [#allocation11], %s476
        %p478 = pneg %p321
        %p479 = pneg %p318
        %s480 = sand.u32 %s34, 1
        %s481 = scalar_lea.sflag [#allocation12], %s480
        %s482 = sand.u32 %s308, 1
        %s483 = smul.addr %s482, 4
        %s484 = scalar_lea.vmem [#allocation13], %s483
        %v486 = vld [vmem:[%s424] sm:$0xff]
        %v487 = vld [vmem:[%s1] sm:$0x1]
        %v488 = vld [vmem:[%s2] sm:$0x1]
        %489 = vadd.xlane.f32.xlu0 %v486
        %v490 = vpop.xlane.xlu0 %489
        %v491 = vrcp.pop 128.0
        %v492 = vmul.f32 %v490, %v491
        %v493 = vsub.f32 %v486, %v492
        %v494 = vmul.f32 %v493, %v493
        %495 = vadd.xlane.f32.xlu0 %v494
        %v496 = vpop.xlane.xlu0 %495
        %v497 = vmul.f32 %v496, 0.007874016
        %v498 = vrsqrt.pop %v497
        %v499 = vmul.f32 %v497, %v498
        %vm500 = vcmp.eq.f32.partialorder %v497, inf
        %v501 = vsel %vm500, %v497, %v499
        %vm502 = vcmp.eq.f32.partialorder %v497, 0.0
        %v503 = vand.u32 %v497, 2147483648
        %v504 = vsel %vm502, %v503, %v501
        %v505 = vadd.f32 %v504, 1e-06
        %v506 = vrcp.pop %v505
        %v507 = vmul.f32 %v493, %v506
        %v509 = vlaneseq
        %v510 = vshrl.u32 %v509, 7
        %v511 = vsub.s32 0, %v510
        %v512 = vrot.slane %v487, %v511
        %v514 = vmul.f32 %v512, %v507
        %v516 = vlaneseq
        %v517 = vshrl.u32 %v516, 7
        %v518 = vsub.s32 0, %v517
        %v519 = vrot.slane %v488, %v518
        %v521 = vadd.f32 %v514, %v519
        %v522 = vpack.c.bf16 %v521, %v521
        %v523 = vld [vmem:[#allocation5] sm:$0xf]
        %v524 = vld [vmem:[#allocation5 + $0x4] sm:$0xf]
        %v525 = vld [vmem:[#allocation5 + $0x8] sm:$0xf]
        %v526 = vld [vmem:[#allocation5 + $0xc] sm:$0xf]
        %v527 = vld [vmem:[#allocation5 + $0x10] sm:$0xf]
        %v528 = vld [vmem:[#allocation5 + $0x14] sm:$0xf]
        %v529 = vld [vmem:[#allocation5 + $0x18] sm:$0xf]
        %v530 = vld [vmem:[#allocation5 + $0x1c] sm:$0xf]
        %v531 = vld [vmem:[#allocation5 + $0x20] sm:$0xf]
        %v532 = vld [vmem:[#allocation5 + $0x24] sm:$0xf]
        %v533 = vld [vmem:[#allocation5 + $0x28] sm:$0xf]
        %v534 = vld [vmem:[#allocation5 + $0x2c] sm:$0xf]
        %v535 = vld [vmem:[#allocation5 + $0x30] sm:$0xf]
        %v536 = vld [vmem:[#allocation5 + $0x34] sm:$0xf]
        %v537 = vld [vmem:[#allocation5 + $0x38] sm:$0xf]
        %v538 = vld [vmem:[#allocation5 + $0x3c] sm:$0xf]
        %v539 = vld [vmem:[%s4] sm:$0x1]
        %v541 = vlaneseq
        %v542 = vshrl.u32 %v541, 7
        %v543 = vsub.s32 0, %v542
        %v544 = vrot.slane %v539, %v543
        %v562 = vunpack.c.l.b16 %v523
        %v563 = vunpack.c.l.b16 %v524
        %v564 = vunpack.c.l.b16 %v525
        %v565 = vunpack.c.l.b16 %v526
        %v566 = vunpack.c.l.b16 %v527
        %v567 = vunpack.c.l.b16 %v528
        %v568 = vunpack.c.l.b16 %v529
        %v569 = vunpack.c.l.b16 %v530
        %v570 = vunpack.c.l.b16 %v531
        %v571 = vunpack.c.l.b16 %v532
        %v572 = vunpack.c.l.b16 %v533
        %v573 = vunpack.c.l.b16 %v534
        %v574 = vunpack.c.l.b16 %v535
        %v575 = vunpack.c.l.b16 %v536
        %v576 = vunpack.c.l.b16 %v537
        %v577 = vunpack.c.l.b16 %v538
        %v578 = vpack.c.b16 %v563, %v562
        %v579 = vpack.c.b16 %v565, %v564
        %v580 = vpack.c.b16 %v567, %v566
        %v581 = vpack.c.b16 %v569, %v568
        %v582 = vpack.c.b16 %v571, %v570
        %v583 = vpack.c.b16 %v573, %v572
        %v584 = vpack.c.b16 %v575, %v574
        %v585 = vpack.c.b16 %v577, %v576
        %594 = vmatprep.subr.bf16.mxu0 0
        %595 = vmatpush1.bf16.msra.mxu0 %v578
        %596 = vmatprep.subr.bf16.mxu0 0
        %597 = vmatpush1.bf16.msra.mxu0 %v579
        %598 = vmatprep.subr.bf16.mxu0 0
        %599 = vmatpush1.bf16.msra.mxu0 %v580
        %600 = vmatprep.subr.bf16.mxu0 0
        %601 = vmatpush1.bf16.msra.mxu0 %v581
        %602 = vmatprep.subr.bf16.mxu0 0
        %603 = vmatpush1.bf16.msra.mxu0 %v582
        %604 = vmatprep.subr.bf16.mxu0 0
        %605 = vmatpush1.bf16.msra.mxu0 %v583
        %606 = vmatprep.subr.bf16.mxu0 0
        %607 = vmatpush1.bf16.msra.mxu0 %v584
        %608 = vmatprep.subr.bf16.mxu0 0
        %609 = vmatpush1.bf16.msra.mxu0 %v585
        %610 = vmatprep.subr.bf16.mxu0 0
        %611 = vmatpush1.bf16.msra.mxu0 0
        %612 = vmatprep.subr.bf16.mxu0 0
        %613 = vmatpush1.bf16.msra.mxu0 0
        %614 = vmatprep.subr.bf16.mxu0 0
        %615 = vmatpush1.bf16.msra.mxu0 0
        %616 = vmatprep.subr.bf16.mxu0 0
        %617 = vmatpush1.bf16.msra.mxu0 0
        %618 = vmatprep.subr.bf16.mxu0 0
        %619 = vmatpush1.bf16.msra.mxu0 0
        %620 = vmatprep.subr.bf16.mxu0 0
        %621 = vmatpush1.bf16.msra.mxu0 0
        %622 = vmatprep.subr.bf16.mxu0 0
        %623 = vmatpush1.bf16.msra.mxu0 0
        %624 = vmatprep.subr.bf16.mxu0 0
        %625 = vmatpush1.bf16.msra.mxu0 0
        %626 = vmatprep.mubr.bf16.mxu0 0
        %627 = vmatmul.mubr.bf16.gmra.mrb[0].mxu0 %v522
        %v628 = vpop.f32.mrb[0].mxu0
        %v629 = vadd.f32 %v544, %v628
        %v630 = vpop.f32.mrb[0].mxu0
        %v631 = vpop.f32.mrb[0].mxu0
        %v632 = vpop.f32.mrb[0].mxu0
        %633 = vdwg.mxu0
        %v634 = vmul.f32 %v629, 0.17677669
        %v635 = vpack.c.bf16 %v634, %v634
        %636 = vst [vmem:[%s470] sm:$0xf] %v635
        %v637 = vld [vmem:[#allocation7] sm:$0xf]
        %v638 = vld [vmem:[#allocation7 + $0x4] sm:$0xf]
        %v639 = vld [vmem:[#allocation7 + $0x8] sm:$0xf]
        %v640 = vld [vmem:[#allocation7 + $0xc] sm:$0xf]
        %v641 = vld [vmem:[#allocation7 + $0x10] sm:$0xf]
        %v642 = vld [vmem:[#allocation7 + $0x14] sm:$0xf]
        %v643 = vld [vmem:[#allocation7 + $0x18] sm:$0xf]
        %v644 = vld [vmem:[#allocation7 + $0x1c] sm:$0xf]
        %v645 = vld [vmem:[#allocation7 + $0x20] sm:$0xf]
        %v646 = vld [vmem:[#allocation7 + $0x24] sm:$0xf]
        %v647 = vld [vmem:[#allocation7 + $0x28] sm:$0xf]
        %v648 = vld [vmem:[#allocation7 + $0x2c] sm:$0xf]
        %v649 = vld [vmem:[#allocation7 + $0x30] sm:$0xf]
        %v650 = vld [vmem:[#allocation7 + $0x34] sm:$0xf]
        %v651 = vld [vmem:[#allocation7 + $0x38] sm:$0xf]
        %v652 = vld [vmem:[#allocation7 + $0x3c] sm:$0xf]
        %v653 = vld [vmem:[%s6] sm:$0x1]
        %v655 = vlaneseq
        %v656 = vshrl.u32 %v655, 7
        %v657 = vsub.s32 0, %v656
        %v658 = vrot.slane %v653, %v657
        %v676 = vunpack.c.l.b16 %v637
        %v677 = vunpack.c.l.b16 %v638
        %v678 = vunpack.c.l.b16 %v639
        %v679 = vunpack.c.l.b16 %v640
        %v680 = vunpack.c.l.b16 %v641
        %v681 = vunpack.c.l.b16 %v642
        %v682 = vunpack.c.l.b16 %v643
        %v683 = vunpack.c.l.b16 %v644
        %v684 = vunpack.c.l.b16 %v645
        %v685 = vunpack.c.l.b16 %v646
        %v686 = vunpack.c.l.b16 %v647
        %v687 = vunpack.c.l.b16 %v648
        %v688 = vunpack.c.l.b16 %v649
        %v689 = vunpack.c.l.b16 %v650
        %v690 = vunpack.c.l.b16 %v651
        %v691 = vunpack.c.l.b16 %v652
        %v692 = vpack.c.b16 %v677, %v676
        %v693 = vpack.c.b16 %v679, %v678
        %v694 = vpack.c.b16 %v681, %v680
        %v695 = vpack.c.b16 %v683, %v682
        %v696 = vpack.c.b16 %v685, %v684
        %v697 = vpack.c.b16 %v687, %v686
        %v698 = vpack.c.b16 %v689, %v688
        %v699 = vpack.c.b16 %v691, %v690
        %708 = vmatprep.subr.bf16.mxu0 0
        %709 = vmatpush1.bf16.msra.mxu0 %v692
        %710 = vmatprep.subr.bf16.mxu0 0
        %711 = vmatpush1.bf16.msra.mxu0 %v693
        %712 = vmatprep.subr.bf16.mxu0 0
        %713 = vmatpush1.bf16.msra.mxu0 %v694
        %714 = vmatprep.subr.bf16.mxu0 0
        %715 = vmatpush1.bf16.msra.mxu0 %v695
        %716 = vmatprep.subr.bf16.mxu0 0
        %717 = vmatpush1.bf16.msra.mxu0 %v696
        %718 = vmatprep.subr.bf16.mxu0 0
        %719 = vmatpush1.bf16.msra.mxu0 %v697
        %720 = vmatprep.subr.bf16.mxu0 0
        %721 = vmatpush1.bf16.msra.mxu0 %v698
        %722 = vmatprep.subr.bf16.mxu0 0
        %723 = vmatpush1.bf16.msra.mxu0 %v699
        %724 = vmatprep.subr.bf16.mxu0 0
        %725 = vmatpush1.bf16.msra.mxu0 0
        %726 = vmatprep.subr.bf16.mxu0 0
        %727 = vmatpush1.bf16.msra.mxu0 0
        %728 = vmatprep.subr.bf16.mxu0 0
        %729 = vmatpush1.bf16.msra.mxu0 0
        %730 = vmatprep.subr.bf16.mxu0 0
        %731 = vmatpush1.bf16.msra.mxu0 0
        %732 = vmatprep.subr.bf16.mxu0 0
        %733 = vmatpush1.bf16.msra.mxu0 0
        %734 = vmatprep.subr.bf16.mxu0 0
        %735 = vmatpush1.bf16.msra.mxu0 0
        %736 = vmatprep.subr.bf16.mxu0 0
        %737 = vmatpush1.bf16.msra.mxu0 0
        %738 = vmatprep.subr.bf16.mxu0 0
        %739 = vmatpush1.bf16.msra.mxu0 0
        %740 = vmatprep.mubr.bf16.mxu0 0
        %741 = vmatmul.mubr.bf16.gmra.mrb[0].mxu0 %v522
        %v742 = vpop.f32.mrb[0].mxu0
        %v743 = vadd.f32 %v658, %v742
        %v744 = vpop.f32.mrb[0].mxu0
        %v745 = vpop.f32.mrb[0].mxu0
        %v746 = vpop.f32.mrb[0].mxu0
        %747 = vdwg.mxu0
        %v748 = vpack.c.bf16 %v743, %v743
        %749 = vst [vmem:[%s477] sm:$0xf] %v748
        %v750 = vld [vmem:[#allocation8] sm:$0xf]
        %v751 = vld [vmem:[#allocation8 + $0x4] sm:$0xf]
        %v752 = vld [vmem:[#allocation8 + $0x8] sm:$0xf]
        %v753 = vld [vmem:[#allocation8 + $0xc] sm:$0xf]
        %v754 = vld [vmem:[#allocation8 + $0x10] sm:$0xf]
        %v755 = vld [vmem:[#allocation8 + $0x14] sm:$0xf]
        %v756 = vld [vmem:[#allocation8 + $0x18] sm:$0xf]
        %v757 = vld [vmem:[#allocation8 + $0x1c] sm:$0xf]
        %v758 = vld [vmem:[#allocation8 + $0x20] sm:$0xf]
        %v759 = vld [vmem:[#allocation8 + $0x24] sm:$0xf]
        %v760 = vld [vmem:[#allocation8 + $0x28] sm:$0xf]
        %v761 = vld [vmem:[#allocation8 + $0x2c] sm:$0xf]
        %v762 = vld [vmem:[#allocation8 + $0x30] sm:$0xf]
        %v763 = vld [vmem:[#allocation8 + $0x34] sm:$0xf]
        %v764 = vld [vmem:[#allocation8 + $0x38] sm:$0xf]
        %v765 = vld [vmem:[#allocation8 + $0x3c] sm:$0xf]
        %v766 = vld [vmem:[%s8] sm:$0x1]
        %v768 = vlaneseq
        %v769 = vshrl.u32 %v768, 7
        %v770 = vsub.s32 0, %v769
        %v771 = vrot.slane %v766, %v770
        %v789 = vunpack.c.l.b16 %v750
        %v790 = vunpack.c.l.b16 %v751
        %v791 = vunpack.c.l.b16 %v752
        %v792 = vunpack.c.l.b16 %v753
        %v793 = vunpack.c.l.b16 %v754
        %v794 = vunpack.c.l.b16 %v755
        %v795 = vunpack.c.l.b16 %v756
        %v796 = vunpack.c.l.b16 %v757
        %v797 = vunpack.c.l.b16 %v758
        %v798 = vunpack.c.l.b16 %v759
        %v799 = vunpack.c.l.b16 %v760
        %v800 = vunpack.c.l.b16 %v761
        %v801 = vunpack.c.l.b16 %v762
        %v802 = vunpack.c.l.b16 %v763
        %v803 = vunpack.c.l.b16 %v764
        %v804 = vunpack.c.l.b16 %v765
        %v805 = vpack.c.b16 %v790, %v789
        %v806 = vpack.c.b16 %v792, %v791
        %v807 = vpack.c.b16 %v794, %v793
        %v808 = vpack.c.b16 %v796, %v795
        %v809 = vpack.c.b16 %v798, %v797
        %v810 = vpack.c.b16 %v800, %v799
        %v811 = vpack.c.b16 %v802, %v801
        %v812 = vpack.c.b16 %v804, %v803
        %821 = vmatprep.subr.bf16.mxu0 0
        %822 = vmatpush1.bf16.msra.mxu0 %v805
        %823 = vmatprep.subr.bf16.mxu0 0
        %824 = vmatpush1.bf16.msra.mxu0 %v806
        %825 = vmatprep.subr.bf16.mxu0 0
        %826 = vmatpush1.bf16.msra.mxu0 %v807
        %827 = vmatprep.subr.bf16.mxu0 0
        %828 = vmatpush1.bf16.msra.mxu0 %v808
        %829 = vmatprep.subr.bf16.mxu0 0
        %830 = vmatpush1.bf16.msra.mxu0 %v809
        %831 = vmatprep.subr.bf16.mxu0 0
        %832 = vmatpush1.bf16.msra.mxu0 %v810
        %833 = vmatprep.subr.bf16.mxu0 0
        %834 = vmatpush1.bf16.msra.mxu0 %v811
        %835 = vmatprep.subr.bf16.mxu0 0
        %836 = vmatpush1.bf16.msra.mxu0 %v812
        %837 = vmatprep.subr.bf16.mxu0 0
        %838 = vmatpush1.bf16.msra.mxu0 0
        %839 = vmatprep.subr.bf16.mxu0 0
        %840 = vmatpush1.bf16.msra.mxu0 0
        %841 = vmatprep.subr.bf16.mxu0 0
        %842 = vmatpush1.bf16.msra.mxu0 0
        %843 = vmatprep.subr.bf16.mxu0 0
        %844 = vmatpush1.bf16.msra.mxu0 0
        %845 = vmatprep.subr.bf16.mxu0 0
        %846 = vmatpush1.bf16.msra.mxu0 0
        %847 = vmatprep.subr.bf16.mxu0 0
        %848 = vmatpush1.bf16.msra.mxu0 0
        %849 = vmatprep.subr.bf16.mxu0 0
        %850 = vmatpush1.bf16.msra.mxu0 0
        %851 = vmatprep.subr.bf16.mxu0 0
        %852 = vmatpush1.bf16.msra.mxu0 0
        %853 = vmatprep.mubr.bf16.mxu0 0
        %854 = vmatmul.mubr.bf16.gmra.mrb[0].mxu0 %v522
        %v855 = vpop.f32.mrb[0].mxu0
        %v856 = vadd.f32 %v771, %v855
        %v857 = vpop.f32.mrb[0].mxu0
        %v858 = vpop.f32.mrb[0].mxu0
        %v859 = vpop.f32.mrb[0].mxu0
        %860 = vdwg.mxu0
        %v861 = vpack.c.bf16 %v856, %v856
        %862 = vst [vmem:[%s484] sm:$0xf] %v861
        %s863 = sand.u32 %s252, 1
        %s864 = scalar_lea.sflag [#allocation4], %s863
        %s865 = sand.u32 %s252, 1
        %s866 = smul.addr %s865, 4
        %s867 = scalar_lea.vmem [#allocation10], %s866
        %s868 = sand.u32 %s34, 1
        %s869 = scalar_lea.sflag [#allocation12], %s868
        %s870 = sand.u32 %s280, 1
        %s871 = smul.addr %s870, 4
        %s872 = scalar_lea.vmem [#allocation11], %s871
        %s873 = sand.u32 %s34, 1
        %s874 = scalar_lea.sflag [#allocation12], %s873
        %s875 = sand.u32 %s308, 1
        %s876 = smul.addr %s875, 4
        %s877 = scalar_lea.vmem [#allocation13], %s876
        // Predicated region
        $region73: #{tpu_custom_call.1} parent=55 // pred_check
          %p878 = pneg %p262
        $region74: #{tpu_custom_call.1} parent=55 // pred_check_branch
          %880 = sbr.rel (%p878) target = $region76
        $region75: #{tpu_custom_call.1} parent=55 // pred_region
          %s882 = ssub.s32 64, 64
          %883 = vsyncadd %s864, %s882
          %s884 = sadd.s32 %s39, %s38
          %s885 = smul.addr %s884, 64
          %s886 = scalar_lea.hbm %s9, %s885
          %s888 = sshll.u32 %s867, 4
          %s889 = int_to_ptr.vmem [resolvable:$true] %s888
          %891 = dma.vmem_to_hbm [thread:$0]  %s889, 64, %s886, %s864
        $region76: #{tpu_custom_call.1} parent=55 // pred_fallthru
          _
        // Predicated region
        $region77: #{tpu_custom_call.1} parent=55 // pred_check
          %p892 = pneg %p290
        $region78: #{tpu_custom_call.1} parent=55 // pred_check_branch
          %894 = sbr.rel (%p892) target = $region80
        $region79: #{tpu_custom_call.1} parent=55 // pred_region
          %s896 = ssub.s32 64, 64
          %897 = vsyncadd %s869, %s896
          %s898 = sadd.s32 %s39, %s38
          %s899 = smul.addr %s898, 64
          %s900 = scalar_lea.hbm %s10, %s899
          %s902 = sshll.u32 %s872, 4
          %s903 = int_to_ptr.vmem [resolvable:$true] %s902
          %905 = dma.vmem_to_hbm [thread:$0]  %s903, 64, %s900, %s869
        $region80: #{tpu_custom_call.1} parent=55 // pred_fallthru
          _
        // Predicated region
        $region81: #{tpu_custom_call.1} parent=55 // pred_check
          %p906 = pneg %p318
        $region82: #{tpu_custom_call.1} parent=55 // pred_check_branch
          %908 = sbr.rel (%p906) target = $region84
        $region83: #{tpu_custom_call.1} parent=55 // pred_region
          %s910 = ssub.s32 64, 64
          %911 = vsyncadd %s874, %s910
          %s912 = sadd.s32 %s39, %s38
          %s913 = smul.addr %s912, 64
          %s914 = scalar_lea.hbm %s11, %s913
          %s916 = sshll.u32 %s877, 4
          %s917 = int_to_ptr.vmem [resolvable:$true] %s916
          %919 = dma.vmem_to_hbm [thread:$0]  %s917, 64, %s914, %s874
        $region84: #{tpu_custom_call.1} parent=55 // pred_fallthru
          _
      $region56: #{tpu_custom_call.1} parent=5 // pred_fallthru
        _
      %p920 = scmp.le.s32.totalorder 2, %s29
      // Predicated region
      $region85: #{tpu_custom_call.1} parent=5 // pred_check
        %p921 = pneg %p920
      $region86: #{tpu_custom_call.1} parent=5 // pred_check_branch
        %923 = sbr.rel (%p921) target = $region88
      $region87: #{tpu_custom_call.1} parent=5 // pred_region
        %s924 = ssub.s32 %s29, 2
        // Predicated region
        $region89: #{tpu_custom_call.1} parent=87 // pred_check
          %p925 = pneg %p268
        $region90: #{tpu_custom_call.1} parent=87 // pred_check_branch
          %927 = sbr.rel (%p925) target = $region92
        $region91: #{tpu_custom_call.1} parent=87 // pred_region
          %s928 = sand.u32 %s253, 1
          %s929 = scalar_lea.sflag [#allocation4], %s928
          %s930 = sand.u32 %s253, 1
          %s931 = smul.addr %s930, 4
          %s932 = scalar_lea.vmem [#allocation10], %s931
          %933 = dma.done %s929, 64
        $region92: #{tpu_custom_call.1} parent=87 // pred_fallthru
          _
        // Predicated region
        $region93: #{tpu_custom_call.1} parent=87 // pred_check
          %p934 = pneg %p296
        $region94: #{tpu_custom_call.1} parent=87 // pred_check_branch
          %936 = sbr.rel (%p934) target = $region96
        $region95: #{tpu_custom_call.1} parent=87 // pred_region
          %s937 = sand.u32 %s35, 1
          %s938 = scalar_lea.sflag [#allocation12], %s937
          %s939 = sand.u32 %s281, 1
          %s940 = smul.addr %s939, 4
          %s941 = scalar_lea.vmem [#allocation11], %s940
          %942 = dma.done %s938, 64
        $region96: #{tpu_custom_call.1} parent=87 // pred_fallthru
          _
        // Predicated region
        $region97: #{tpu_custom_call.1} parent=87 // pred_check
          %p943 = pneg %p324
        $region98: #{tpu_custom_call.1} parent=87 // pred_check_branch
          %945 = sbr.rel (%p943) target = $region100
        $region99: #{tpu_custom_call.1} parent=87 // pred_region
          %s946 = sand.u32 %s35, 1
          %s947 = scalar_lea.sflag [#allocation12], %s946
          %s948 = sand.u32 %s309, 1
          %s949 = smul.addr %s948, 4
          %s950 = scalar_lea.vmem [#allocation13], %s949
          %951 = dma.done %s947, 64
        $region100: #{tpu_custom_call.1} parent=87 // pred_fallthru
          _
      $region88: #{tpu_custom_call.1} parent=5 // pred_fallthru
        _
    $region6: #{tpu_custom_call.1} parent=1 // loop_footer
      %s33 = sadd.s32 1, %s29
    $region7: #{tpu_custom_call.1} parent=1 // loop_footer_branch
      %28 = sbr.rel target = $region3
    $region8: #{tpu_custom_call.1} parent=1 // loop_exit
      _
    %952 = vsyncpa [#allocation3], 1
    %s953 = scalar_lea.sflag [#allocation3], 1
    %954 = vsyncpa %s953, 1
    %955 = vsyncpa [#allocation6], 1
    %956 = vsyncpa [#allocation9], 1
    %957 = vsyncpa [#allocation4], 1
    %s958 = scalar_lea.sflag [#allocation4], 1
    %959 = vsyncpa %s958, 1
    %960 = vsyncpa [#allocation12], 1
    %s961 = scalar_lea.sflag [#allocation12], 1
    %962 = vsyncpa %s961, 1

</llo_original>
